<compile_context>
chip_gen: v7x
topology: tpu7x:2x2x1
jax: 0.10.0
libtpu: 0.0.40
codegen_flags: <defaults>
</compile_context>

<pallas_src>
import functools

import jax
import jax.numpy as jnp
import numpy as np
from jax.experimental import pallas as pl
from jax.experimental.pallas import tpu as pltpu


def _pair(v):
    if isinstance(v, (tuple, list)):
        assert len(v) == 2
        return tuple(int(t) for t in v)
    return (int(v), int(v))


def _quadruple(v):
    if isinstance(v, (tuple, list)):
        assert len(v) == 4
        return tuple(int(t) for t in v)
    return (int(v),) * 4


# ---------------------------------------------------------------------------
# Median selection networks.  Pure VPU min/max (compare-exchange) networks
# operating elementwise on equal-shaped arrays.  All of them return the exact
# value sorted[(n-1)//2] of the window multiset == torch.median's result.
# ---------------------------------------------------------------------------

def _cas(a, b):
    """Compare-exchange: (min, max)."""
    return jnp.minimum(a, b), jnp.maximum(a, b)


def _sort3(a, b, c):
    a, b = _cas(a, b)
    b, c = _cas(b, c)
    a, b = _cas(a, b)
    return a, b, c


def _median3(a, b, c):
    lo, hi = _cas(a, b)
    return jnp.maximum(lo, jnp.minimum(hi, c))


def _median9(windows):
    """19-compare-exchange median-of-9 selection network (Smith/Devillard)."""
    p = list(windows)
    p[1], p[2] = _cas(p[1], p[2]); p[4], p[5] = _cas(p[4], p[5]); p[7], p[8] = _cas(p[7], p[8])
    p[0], p[1] = _cas(p[0], p[1]); p[3], p[4] = _cas(p[3], p[4]); p[6], p[7] = _cas(p[6], p[7])
    p[1], p[2] = _cas(p[1], p[2]); p[4], p[5] = _cas(p[4], p[5]); p[7], p[8] = _cas(p[7], p[8])
    p[0], p[3] = _cas(p[0], p[3]); p[5], p[8] = _cas(p[5], p[8]); p[4], p[7] = _cas(p[4], p[7])
    p[3], p[6] = _cas(p[3], p[6]); p[1], p[4] = _cas(p[1], p[4]); p[2], p[5] = _cas(p[2], p[5])
    p[4], p[7] = _cas(p[4], p[7]); p[4], p[2] = _cas(p[4], p[2]); p[6], p[4] = _cas(p[6], p[4])
    p[4], p[2] = _cas(p[4], p[2])
    return p[4]


def _minmax_drop(vals):
    """Remove one global min and one global max from `vals` using only CEs.

    Multiset-preserving comparator network; returns len(vals) - 2 arrays.
    """
    s = len(vals)
    assert s >= 3
    half = s // 2
    a = list(vals[:half])
    b = list(vals[half:2 * half])
    rest = list(vals[2 * half:])          # [] or [x] (odd s)
    for i in range(half):                 # pair: a[i] <= b[i]
        a[i], b[i] = _cas(a[i], b[i])
    for i in range(1, half):              # bubble min(a) into a[0]
        a[0], a[i] = _cas(a[0], a[i])
    for i in range(half - 1):             # bubble max(b) into b[-1]
        b[i], b[half - 1] = _cas(b[i], b[half - 1])
    if rest:
        x = rest[0]
        a[0], x = _cas(a[0], x)                   # a[0]  = global min
        x, b[half - 1] = _cas(x, b[half - 1])     # b[-1] = global max
        rest = [x]
    return a[1:] + b[:half - 1] + rest


def _median_forgetful(vals):
    """Forgetful selection of the median of an odd number of values.

    Start with m+2 values (n = 2m+1), repeatedly drop the working min & max
    and add one fresh value; the single survivor is sorted[m].  Correct as a
    comparator selection network (0-1 principle), ties included.
    """
    n = len(vals)
    assert n % 2 == 1 and n >= 3
    m = (n - 1) // 2
    work = _minmax_drop(list(vals[:m + 2]))
    for v in vals[m + 2:]:
        work.append(v)
        work = _minmax_drop(work)
    assert len(work) == 1
    return work[0]


def _median_full_sort(vals):
    """Odd-even transposition sort; picks sorted[(n-1)//2].  Even-n fallback."""
    w = list(vals)
    n = len(w)
    for ph in range(n):
        for i in range(ph % 2, n - 1, 2):
            w[i], w[i + 1] = _cas(w[i], w[i + 1])
    return w[(n - 1) // 2]


def _select_median(windows):
    n = len(windows)
    if n == 1:
        return windows[0]
    if n == 9:
        return _median9(windows)
    if n % 2 == 1:
        return _median_forgetful(windows)
    return _median_full_sort(windows)


# ---------------------------------------------------------------------------
# Kernel
# ---------------------------------------------------------------------------

def _median_pool_kernel(x_ref, o_ref, *scratch, k, stride, pads, out_h, out_w):
    """x_ref: (H, W, nc_block) unpadded slab (N*C on lanes).
    scratch (optional): (Hp, Wp, nc_block) VMEM slab used for in-kernel
    reflect padding.  o_ref: (Ho, Wo, nc_block)."""
    kh, kw = k
    sh, sw = stride
    p_l, p_r, p_t, p_b = pads
    H, W = x_ref.shape[0], x_ref.shape[1]

    if scratch:
        pad_ref = scratch[0]
        # Center.
        pad_ref[p_t:p_t + H, p_l:p_l + W, :] = x_ref[...]
        # Reflected W borders (left / right), sourced from the input block.
        for j in range(p_l):
            c = p_l - j
            pad_ref[p_t:p_t + H, j:j + 1, :] = x_ref[:, c:c + 1, :]
        for j in range(p_r):
            d = p_l + W + j
            c = W - 2 - j
            pad_ref[p_t:p_t + H, d:d + 1, :] = x_ref[:, c:c + 1, :]
        # Reflected H borders (top / bottom), sourced from already W-padded rows
        # so the corners come out right (same as sequential reflect per axis).
        for i in range(p_t):
            r = 2 * p_t - i
            pad_ref[i:i + 1, :, :] = pad_ref[r:r + 1, :, :]
        for i in range(p_b):
            d = p_t + H + i
            r = p_t + H - 2 - i
            pad_ref[d:d + 1, :, :] = pad_ref[r:r + 1, :, :]
        src = pad_ref
    else:
        src = x_ref

    # ---- exact separable 3x3 / stride-1 median -----------------------------
    if kh == 3 and kw == 3 and sh == 1 and sw == 1:
        v0 = src[0:out_h, :, :]          # major-axis (H) offsets: cheap
        v1 = src[1:out_h + 1, :, :]
        v2 = src[2:out_h + 2, :, :]
        lo, mid, hi = _sort3(v0, v1, v2)             # shared vertical sort
        los = [lo[:, j:j + out_w, :] for j in range(3)]
        mids = [mid[:, j:j + out_w, :] for j in range(3)]
        his = [hi[:, j:j + out_w, :] for j in range(3)]
        max_lo = jnp.maximum(jnp.maximum(los[0], los[1]), los[2])
        min_hi = jnp.minimum(jnp.minimum(his[0], his[1]), his[2])
        med_mid = _median3(mids[0], mids[1], mids[2])
        o_ref[...] = _median3(max_lo, med_mid, min_hi)
        return

    # ---- general path: hoist the kw sublane shifts, cheap H offsets --------
    h_need = (out_h - 1) * sh + kh
    cols = []
    for dj in range(kw):
        if sw == 1:
            cols.append(src[0:h_need, dj:dj + out_w, :])
        else:
            # Stride applied directly in the Ref read (no oversized load).
            cols.append(src[0:h_need, pl.ds(dj, out_w, stride=sw), :])

    windows = []
    for di in range(kh):
        for dj in range(kw):
            c = cols[dj]
            if sh == 1:
                windows.append(c[di:di + out_h, :, :])
            else:
                windows.append(c[di:di + (out_h - 1) * sh + 1:sh, :, :])

    o_ref[...] = _select_median(windows)


# ---------------------------------------------------------------------------
# Wrapper
# ---------------------------------------------------------------------------

def _vmem_capacity_bytes():
    try:
        cap = getattr(pltpu.get_tpu_info(), "vmem_capacity_bytes", None)
        if cap:
            return int(cap)
    except Exception:
        pass
    return 64 * 1024 * 1024  # conservative default (v7x per-core VMEM)


def _ce_count(k, s):
    kh, kw = k
    n = kh * kw
    if n == 1:
        return 0
    if kh == 3 and kw == 3 and s == (1, 1):
        return 10
    if n == 9:
        return 19
    if n % 2 == 1:
        m = (n - 1) // 2
        total = 0
        for sz in [m + 2] + list(range(m + 1, 2, -1)):
            half = sz // 2
            total += half + 2 * max(half - 1, 0) + (2 if sz % 2 else 0)
        return total
    return n * (n - 1) // 2


def _choose_nc_block(nc_pad, H, W, Hp, Wp, Ho, Wo, itemsize, k, budget):
    kh, kw = k
    kk = kh * kw

    def fits(b):
        in2 = 2 * H * W * b                       # double-buffered input block
        padb = Hp * Wp * b                        # in-kernel reflect-pad scratch
        out2 = 2 * Ho * Wo * b                    # double-buffered output block
        live = (kw + kk // 2 + 4) * max(Hp * Wo, Ho * Wp) * b  # cols + live CEs
        return (in2 + padb + out2 + live) * itemsize <= budget

    if nc_pad % 128 != 0:
        # Small-NC path: one block spanning the full (un-padded) lane axis.
        # TODO(synk): halo H-tiling when this exceeds the VMEM budget.
        return nc_pad

    divisors = [d for d in range(128, nc_pad + 1, 128) if nc_pad % d == 0]
    fitting = [d for d in divisors if fits(d)] or [128]
    # Prefer >= 2 grid steps (keeps v7x's second TensorCore busy) and cap the
    # block at 1024 lanes (diminishing returns beyond that).
    pref = [d for d in fitting if d <= 1024 and nc_pad // d >= 2]
    pool = pref or [d for d in fitting if d <= 1024] or fitting
    return max(pool)


def median_pool2d(x, kernel_size=3, stride=1, padding=0, same=False):
    """JAX/Pallas equivalent of MedianPool2d.forward.  x is NCHW."""
    k = _pair(kernel_size)
    s = _pair(stride)
    pad = _quadruple(padding)
    N, C, H, W = x.shape

    if same:
        ph = max(k[0] - s[0], 0) if H % s[0] == 0 else max(k[0] - H % s[0], 0)
        pw = max(k[1] - s[1], 0) if W % s[1] == 0 else max(k[1] - W % s[1], 0)
        p_l = pw // 2
        pad = (p_l, pw - p_l, ph // 2, ph - ph // 2)

    p_l, p_r, p_t, p_b = pad
    NC = N * C
    Hp, Wp = H + p_t + p_b, W + p_l + p_r
    Ho = (Hp - k[0]) // s[0] + 1
    Wo = (Wp - k[1]) // s[1] + 1
    itemsize = np.dtype(x.dtype).itemsize

    # NCHW -> (H, W, N*C): fused batch*channel axis on lanes (single relayout;
    # reflect padding happens inside the kernel, no padded array in HBM).
    xt = jnp.transpose(x.reshape(NC, H, W), (1, 2, 0))

    # Lane-pad NC to a multiple of 128 only when the overhead is small (keeps
    # stores fully lane-dense without inflating HBM traffic for small N*C).
    nc_pad = NC
    if NC % 128 != 0:
        up = -(-NC // 128) * 128
        if up - NC <= NC // 4:
            nc_pad = up
    if nc_pad != NC:
        xt = jnp.pad(xt, ((0, 0), (0, 0), (0, nc_pad - NC)))

    vmem_cap = _vmem_capacity_bytes()
    budget = int(vmem_cap * 0.55)
    vmem_limit = int(vmem_cap * 0.85)

    nc_block = _choose_nc_block(nc_pad, H, W, Hp, Wp, Ho, Wo, itemsize, k, budget)
    grid = (nc_pad // nc_block,)

    needs_pad = any(p > 0 for p in (p_l, p_r, p_t, p_b))
    scratch_shapes = [pltpu.VMEM((Hp, Wp, nc_block), x.dtype)] if needs_pad else []

    kernel = functools.partial(
        _median_pool_kernel,
        k=k, stride=s, pads=(p_l, p_r, p_t, p_b), out_h=Ho, out_w=Wo,
    )

    n_ce = _ce_count(k, s)
    cost = pl.CostEstimate(
        flops=2 * n_ce * Ho * Wo * nc_pad,
        transcendentals=0,
        bytes_accessed=(H * W + Ho * Wo) * nc_pad * itemsize,
    )

    out_hwnc = pl.pallas_call(
        kernel,
        out_shape=jax.ShapeDtypeStruct((Ho, Wo, nc_pad), x.dtype),
        grid=grid,
        in_specs=[pl.BlockSpec((H, W, nc_block), lambda i: (0, 0, i))],
        out_specs=pl.BlockSpec((Ho, Wo, nc_block), lambda i: (0, 0, i)),
        scratch_shapes=scratch_shapes,
        compiler_params=pltpu.CompilerParams(
            dimension_semantics=("parallel",),
            vmem_limit_bytes=vmem_limit,
        ),
        cost_estimate=cost,
    )(xt)

    if nc_pad != NC:
        out_hwnc = out_hwnc[:, :, :NC]
    # (Ho, Wo, N*C) -> NCHW
    return jnp.transpose(out_hwnc, (2, 0, 1)).reshape(N, C, Ho, Wo)


# ---------------------------------------------------------------------------
# Pure-JAX reference (mirrors the PyTorch module) and tests
# ---------------------------------------------------------------------------

def _median_pool2d_ref(x, kernel_size=3, stride=1, padding=0, same=False):
    k = _pair(kernel_size)
    s = _pair(stride)
    pad = _quadruple(padding)
    N, C, H, W = x.shape
    if same:
        ph = max(k[0] - s[0], 0) if H % s[0] == 0 else max(k[0] - H % s[0], 0)
        pw = max(k[1] - s[1], 0) if W % s[1] == 0 else max(k[1] - W % s[1], 0)
        p_l = pw // 2
        pad = (p_l, pw - p_l, ph // 2, ph - ph // 2)
    p_l, p_r, p_t, p_b = pad
    xp = jnp.pad(x, ((0, 0), (0, 0), (p_t, p_b), (p_l, p_r)), mode="reflect")
    Hp, Wp = H + p_t + p_b, W + p_l + p_r
    Ho = (Hp - k[0]) // s[0] + 1
    Wo = (Wp - k[1]) // s[1] + 1
    patches = []
    for di in range(k[0]):
        for dj in range(k[1]):
            patches.append(
                xp[:, :, di:di + (Ho - 1) * s[0] + 1:s[0],
                         dj:dj + (Wo - 1) * s[1] + 1:s[1]]
            )
    st = jnp.stack(patches, axis=-1)
    srt = jnp.sort(st, axis=-1)
    return srt[..., (k[0] * k[1] - 1) // 2]


if __name__ == "__main__":
    # MedianPool2d has no learnable parameters; kernel_size/stride/padding are
    # the module hyperparameters (defaults: k=3, stride=1).
    key = jax.random.PRNGKey(0)
    x = jax.random.normal(key, (2, 4, 16, 16), dtype=jnp.float32)

    # same=True, 3x3, stride 1: separable exact-median path + in-kernel reflect pad.
    out = jax.block_until_ready(median_pool2d(x, 3, 1, 0, same=True))
    ref = _median_pool2d_ref(x, 3, 1, 0, same=True)
    np.testing.assert_allclose(np.asarray(out), np.asarray(ref), rtol=0, atol=0)

    # Module literal defaults (no padding, valid 14x14 output).
    out2 = jax.block_until_ready(median_pool2d(x))
    assert out2.shape == (2, 4, 14, 14)
    np.testing.assert_allclose(np.asarray(out2), np.asarray(_median_pool2d_ref(x)),
                               rtol=0, atol=0)

    # 5x5 exercises the forgetful median-of-25 selection network.
    out3 = jax.block_until_ready(median_pool2d(x, kernel_size=5, same=True))
    np.testing.assert_allclose(
        np.asarray(out3),
        np.asarray(_median_pool2d_ref(x, kernel_size=5, same=True)),
        rtol=0, atol=0)

    # stride=2 exercises the strided Ref read (pl.ds stride) + 19-CE median9.
    out4 = jax.block_until_ready(median_pool2d(x, kernel_size=3, stride=2, same=True))
    np.testing.assert_allclose(
        np.asarray(out4),
        np.asarray(_median_pool2d_ref(x, kernel_size=3, stride=2, same=True)),
        rtol=0, atol=0)

    # Asymmetric explicit padding exercises the in-kernel reflect borders.
    out5 = jax.block_until_ready(median_pool2d(x, kernel_size=3, padding=(1, 2, 0, 1)))
    np.testing.assert_allclose(
        np.asarray(out5),
        np.asarray(_median_pool2d_ref(x, kernel_size=3, padding=(1, 2, 0, 1))),
        rtol=0, atol=0)

    print("KERNEL_OK")
</pallas_src>

<mosaic_0001>
module attributes {stable_mosaic.version = 11 : i64} {
  func.func @_median_pool_kernel(%arg0: i32, %arg1: memref<16x16x8xf32, #tpu.memory_space<vmem>>, %arg2: memref<16x16x8xf32, #tpu.memory_space<vmem>>, %arg3: memref<18x18x8xf32, #tpu.memory_space<vmem>>) attributes {dimension_semantics = [#tpu.dimension_semantics<parallel>], iteration_bounds = array<i64: 1>, scalar_prefetch = 0 : i64, scratch_operands = 1 : i64, tpu.core_type = #tpu.core_type<tc>, window_params = [{transform_indices = @transform_0, window_bounds = array<i64: 16, 16, 8>}, {transform_indices = @transform_1, window_bounds = array<i64: 16, 16, 8>}]} {
    %c0 = arith.constant 0 : index
    %c0_0 = arith.constant 0 : index
    %c0_1 = arith.constant 0 : index
    %0 = vector.load %arg1[%c0, %c0_0, %c0_1] : memref<16x16x8xf32, #tpu.memory_space<vmem>>, vector<16x16x8xf32>
    %c1 = arith.constant 1 : index
    %c1_2 = arith.constant 1 : index
    %c0_3 = arith.constant 0 : index
    %1 = vector.load %arg3[%c1, %c1_2, %c0_3] : memref<18x18x8xf32, #tpu.memory_space<vmem>>, vector<16x16x8xf32>
    tpu.vector_store %arg3[%c1, %c1_2, %c0_3], %0 {strides = array<i32>} : memref<18x18x8xf32, #tpu.memory_space<vmem>>, vector<16x16x8xf32>,
    %c0_4 = arith.constant 0 : index
    %c1_5 = arith.constant 1 : index
    %c0_6 = arith.constant 0 : index
    %2 = vector.load %arg1[%c0_4, %c1_5, %c0_6] : memref<16x16x8xf32, #tpu.memory_space<vmem>>, vector<16x1x8xf32>
    %c1_7 = arith.constant 1 : index
    %c0_8 = arith.constant 0 : index
    %c0_9 = arith.constant 0 : index
    %3 = vector.load %arg3[%c1_7, %c0_8, %c0_9] : memref<18x18x8xf32, #tpu.memory_space<vmem>>, vector<16x1x8xf32>
    tpu.vector_store %arg3[%c1_7, %c0_8, %c0_9], %2 {strides = array<i32>} : memref<18x18x8xf32, #tpu.memory_space<vmem>>, vector<16x1x8xf32>,
    %c0_10 = arith.constant 0 : index
    %c14 = arith.constant 14 : index
    %c0_11 = arith.constant 0 : index
    %4 = vector.load %arg1[%c0_10, %c14, %c0_11] : memref<16x16x8xf32, #tpu.memory_space<vmem>>, vector<16x1x8xf32>
    %c1_12 = arith.constant 1 : index
    %c17 = arith.constant 17 : index
    %c0_13 = arith.constant 0 : index
    %5 = vector.load %arg3[%c1_12, %c17, %c0_13] : memref<18x18x8xf32, #tpu.memory_space<vmem>>, vector<16x1x8xf32>
    tpu.vector_store %arg3[%c1_12, %c17, %c0_13], %4 {strides = array<i32>} : memref<18x18x8xf32, #tpu.memory_space<vmem>>, vector<16x1x8xf32>,
    %c2 = arith.constant 2 : index
    %c0_14 = arith.constant 0 : index
    %c0_15 = arith.constant 0 : index
    %6 = vector.load %arg3[%c2, %c0_14, %c0_15] : memref<18x18x8xf32, #tpu.memory_space<vmem>>, vector<1x18x8xf32>
    %c0_16 = arith.constant 0 : index
    %c0_17 = arith.constant 0 : index
    %c0_18 = arith.constant 0 : index
    %7 = vector.load %arg3[%c0_16, %c0_17, %c0_18] : memref<18x18x8xf32, #tpu.memory_space<vmem>>, vector<1x18x8xf32>
    tpu.vector_store %arg3[%c0_16, %c0_17, %c0_18], %6 {strides = array<i32>} : memref<18x18x8xf32, #tpu.memory_space<vmem>>, vector<1x18x8xf32>,
    %c15 = arith.constant 15 : index
    %c0_19 = arith.constant 0 : index
    %c0_20 = arith.constant 0 : index
    %8 = vector.load %arg3[%c15, %c0_19, %c0_20] : memref<18x18x8xf32, #tpu.memory_space<vmem>>, vector<1x18x8xf32>
    %c17_21 = arith.constant 17 : index
    %c0_22 = arith.constant 0 : index
    %c0_23 = arith.constant 0 : index
    %9 = vector.load %arg3[%c17_21, %c0_22, %c0_23] : memref<18x18x8xf32, #tpu.memory_space<vmem>>, vector<1x18x8xf32>
    tpu.vector_store %arg3[%c17_21, %c0_22, %c0_23], %8 {strides = array<i32>} : memref<18x18x8xf32, #tpu.memory_space<vmem>>, vector<1x18x8xf32>,
    %c0_24 = arith.constant 0 : index
    %c0_25 = arith.constant 0 : index
    %c0_26 = arith.constant 0 : index
    %10 = vector.load %arg3[%c0_24, %c0_25, %c0_26] : memref<18x18x8xf32, #tpu.memory_space<vmem>>, vector<16x18x8xf32>
    %c1_27 = arith.constant 1 : index
    %c0_28 = arith.constant 0 : index
    %c0_29 = arith.constant 0 : index
    %11 = vector.load %arg3[%c1_27, %c0_28, %c0_29] : memref<18x18x8xf32, #tpu.memory_space<vmem>>, vector<16x18x8xf32>
    %c2_30 = arith.constant 2 : index
    %c0_31 = arith.constant 0 : index
    %c0_32 = arith.constant 0 : index
    %12 = vector.load %arg3[%c2_30, %c0_31, %c0_32] : memref<18x18x8xf32, #tpu.memory_space<vmem>>, vector<16x18x8xf32>
    %13 = arith.minimumf %10, %11 : vector<16x18x8xf32>
    %14 = arith.maximumf %10, %11 : vector<16x18x8xf32>
    %15 = arith.minimumf %14, %12 : vector<16x18x8xf32>
    %16 = arith.maximumf %14, %12 : vector<16x18x8xf32>
    %17 = arith.minimumf %13, %15 : vector<16x18x8xf32>
    %18 = arith.maximumf %13, %15 : vector<16x18x8xf32>
    %19 = vector.extract_strided_slice %17 {offsets = [0, 0, 0], sizes = [16, 16, 8], strides = [1, 1, 1]} : vector<16x18x8xf32> to vector<16x16x8xf32>
    %20 = vector.extract_strided_slice %17 {offsets = [0, 1, 0], sizes = [16, 16, 8], strides = [1, 1, 1]} : vector<16x18x8xf32> to vector<16x16x8xf32>
    %21 = vector.extract_strided_slice %17 {offsets = [0, 2, 0], sizes = [16, 16, 8], strides = [1, 1, 1]} : vector<16x18x8xf32> to vector<16x16x8xf32>
    %22 = vector.extract_strided_slice %18 {offsets = [0, 0, 0], sizes = [16, 16, 8], strides = [1, 1, 1]} : vector<16x18x8xf32> to vector<16x16x8xf32>
    %23 = vector.extract_strided_slice %18 {offsets = [0, 1, 0], sizes = [16, 16, 8], strides = [1, 1, 1]} : vector<16x18x8xf32> to vector<16x16x8xf32>
    %24 = vector.extract_strided_slice %18 {offsets = [0, 2, 0], sizes = [16, 16, 8], strides = [1, 1, 1]} : vector<16x18x8xf32> to vector<16x16x8xf32>
    %25 = vector.extract_strided_slice %16 {offsets = [0, 0, 0], sizes = [16, 16, 8], strides = [1, 1, 1]} : vector<16x18x8xf32> to vector<16x16x8xf32>
    %26 = vector.extract_strided_slice %16 {offsets = [0, 1, 0], sizes = [16, 16, 8], strides = [1, 1, 1]} : vector<16x18x8xf32> to vector<16x16x8xf32>
    %27 = vector.extract_strided_slice %16 {offsets = [0, 2, 0], sizes = [16, 16, 8], strides = [1, 1, 1]} : vector<16x18x8xf32> to vector<16x16x8xf32>
    %28 = arith.maximumf %19, %20 : vector<16x16x8xf32>
    %29 = arith.maximumf %28, %21 : vector<16x16x8xf32>
    %30 = arith.minimumf %25, %26 : vector<16x16x8xf32>
    %31 = arith.minimumf %30, %27 : vector<16x16x8xf32>
    %32 = arith.minimumf %22, %23 : vector<16x16x8xf32>
    %33 = arith.maximumf %22, %23 : vector<16x16x8xf32>
    %34 = arith.minimumf %33, %24 : vector<16x16x8xf32>
    %35 = arith.maximumf %32, %34 : vector<16x16x8xf32>
    %36 = arith.minimumf %29, %35 : vector<16x16x8xf32>
    %37 = arith.maximumf %29, %35 : vector<16x16x8xf32>
    %38 = arith.minimumf %37, %31 : vector<16x16x8xf32>
    %39 = arith.maximumf %36, %38 : vector<16x16x8xf32>
    %c0_33 = arith.constant 0 : index
    %c0_34 = arith.constant 0 : index
    %c0_35 = arith.constant 0 : index
    %40 = vector.load %arg2[%c0_33, %c0_34, %c0_35] : memref<16x16x8xf32, #tpu.memory_space<vmem>>, vector<16x16x8xf32>
    tpu.vector_store %arg2[%c0_33, %c0_34, %c0_35], %39 {strides = array<i32>} : memref<16x16x8xf32, #tpu.memory_space<vmem>>, vector<16x16x8xf32>,
    return
  }
  func.func @transform_0(%arg0: i32) -> (i32, i32, i32) {
    %c0_i32 = arith.constant 0 : i32
    %c0_i32_0 = arith.constant 0 : i32
    %c0_i32_1 = arith.constant 0 : i32
    return %c0_i32, %c0_i32_0, %arg0 : i32, i32, i32
  }
  func.func @transform_1(%arg0: i32) -> (i32, i32, i32) {
    %c0_i32 = arith.constant 0 : i32
    %c0_i32_0 = arith.constant 0 : i32
    %c0_i32_1 = arith.constant 0 : i32
    return %c0_i32, %c0_i32_0, %arg0 : i32, i32, i32
  }
}

</mosaic_0001>

<llo_original>
// kernel: tpu_custom_call.1
$region0: #{tpu_custom_call.1}
  #allocation0 [shape = 'u32[]', space=smem, size = 0x4, offset = 0x4, fixed_abs, tag = 'smem constant byte address 0x4 - core index']
  #allocation1 [shape = 'u32[144,128]{1,0:T(1,128)}', space=vmem, size = 0x12000, scoped, tag = 'internal scratch']
  #allocation2 [shape = 'f32[18,18,8]{2,1,0:T(8,128)}', space=vmem, size = 0x36000, scoped, tag = 'scratch operand']
  %s0 = inlined_call_operand.vmem [shape: f32[16,16,8], index: 0, kind: input, shape index: {}]
  %s1 = inlined_call_operand.vmem [shape: f32[16,16,8], index: 1, kind: output, shape index: {}]
  %s2 = sld [smem:[#allocation0]]
  $region14: #{tpu_custom_call.1} parent=0
    _
  %s4 = ssub.s32 1, %s2
  %s5 = scalar_select 0, %s4, %s2
  // Predicated region
  $region2: #{tpu_custom_call.1} parent=0 // pred_check
    _
  $region3: #{tpu_custom_call.1} parent=0 // pred_check_branch
    %7 = sbr.rel (0) target = $region5
  $region4: #{tpu_custom_call.1} parent=0 // pred_region
    _
  $region5: #{tpu_custom_call.1} parent=0 // pred_fallthru
    _
  %v8 = vld [vmem:[%s0] sm:$0xff]
  %v9 = vld [vmem:[%s0 + $0x8] sm:$0xff]
  %v10 = vld [vmem:[%s0 + $0x10] sm:$0xff]
  %v11 = vld [vmem:[%s0 + $0x18] sm:$0xff]
  %v12 = vld [vmem:[%s0 + $0x20] sm:$0xff]
  %v13 = vld [vmem:[%s0 + $0x28] sm:$0xff]
  %v14 = vld [vmem:[%s0 + $0x30] sm:$0xff]
  %v15 = vld [vmem:[%s0 + $0x38] sm:$0xff]
  %v16 = vld [vmem:[%s0 + $0x40] sm:$0xff]
  %v17 = vld [vmem:[%s0 + $0x48] sm:$0xff]
  %v18 = vld [vmem:[%s0 + $0x50] sm:$0xff]
  %v19 = vld [vmem:[%s0 + $0x58] sm:$0xff]
  %v20 = vld [vmem:[%s0 + $0x60] sm:$0xff]
  %v21 = vld [vmem:[%s0 + $0x68] sm:$0xff]
  %v22 = vld [vmem:[%s0 + $0x70] sm:$0xff]
  %v23 = vld [vmem:[%s0 + $0x78] sm:$0xff]
  %v24 = vld [vmem:[%s0 + $0x80] sm:$0xff]
  %v25 = vld [vmem:[%s0 + $0x88] sm:$0xff]
  %v26 = vld [vmem:[%s0 + $0x90] sm:$0xff]
  %v27 = vld [vmem:[%s0 + $0x98] sm:$0xff]
  %v28 = vld [vmem:[%s0 + $0xa0] sm:$0xff]
  %v29 = vld [vmem:[%s0 + $0xa8] sm:$0xff]
  %v30 = vld [vmem:[%s0 + $0xb0] sm:$0xff]
  %v31 = vld [vmem:[%s0 + $0xb8] sm:$0xff]
  %v32 = vld [vmem:[%s0 + $0xc0] sm:$0xff]
  %v33 = vld [vmem:[%s0 + $0xc8] sm:$0xff]
  %v34 = vld [vmem:[%s0 + $0xd0] sm:$0xff]
  %v35 = vld [vmem:[%s0 + $0xd8] sm:$0xff]
  %v36 = vld [vmem:[%s0 + $0xe0] sm:$0xff]
  %v37 = vld [vmem:[%s0 + $0xe8] sm:$0xff]
  %v38 = vld [vmem:[%s0 + $0xf0] sm:$0xff]
  %v39 = vld [vmem:[%s0 + $0xf8] sm:$0xff]
  %s40 = scalar_lea.vmem [#allocation2], 24
  %vm41 = vcmask 64512
  %42 = vst.msk [vmem:[%s40 + $0x1] sm:$0xff] %vm41, %v8
  %43 = vst.msk [vmem:[%s40 + $0x9] sm:$0xff] %vm41, %v9
  %44 = vst.msk [vmem:[%s40 + $0x19] sm:$0xff] %vm41, %v10
  %45 = vst.msk [vmem:[%s40 + $0x21] sm:$0xff] %vm41, %v11
  %46 = vst.msk [vmem:[%s40 + $0x31] sm:$0xff] %vm41, %v12
  %47 = vst.msk [vmem:[%s40 + $0x39] sm:$0xff] %vm41, %v13
  %48 = vst.msk [vmem:[%s40 + $0x49] sm:$0xff] %vm41, %v14
  %49 = vst.msk [vmem:[%s40 + $0x51] sm:$0xff] %vm41, %v15
  %50 = vst.msk [vmem:[%s40 + $0x61] sm:$0xff] %vm41, %v16
  %51 = vst.msk [vmem:[%s40 + $0x69] sm:$0xff] %vm41, %v17
  %52 = vst.msk [vmem:[%s40 + $0x79] sm:$0xff] %vm41, %v18
  %53 = vst.msk [vmem:[%s40 + $0x81] sm:$0xff] %vm41, %v19
  %54 = vst.msk [vmem:[%s40 + $0x91] sm:$0xff] %vm41, %v20
  %55 = vst.msk [vmem:[%s40 + $0x99] sm:$0xff] %vm41, %v21
  %56 = vst.msk [vmem:[%s40 + $0xa9] sm:$0xff] %vm41, %v22
  %57 = vst.msk [vmem:[%s40 + $0xb1] sm:$0xff] %vm41, %v23
  %58 = vst.msk [vmem:[%s40 + $0xc1] sm:$0xff] %vm41, %v24
  %59 = vst.msk [vmem:[%s40 + $0xc9] sm:$0xff] %vm41, %v25
  %60 = vst.msk [vmem:[%s40 + $0xd9] sm:$0xff] %vm41, %v26
  %61 = vst.msk [vmem:[%s40 + $0xe1] sm:$0xff] %vm41, %v27
  %62 = vst.msk [vmem:[%s40 + $0xf1] sm:$0xff] %vm41, %v28
  %63 = vst.msk [vmem:[%s40 + $0xf9] sm:$0xff] %vm41, %v29
  %64 = vst.msk [vmem:[%s40 + $0x109] sm:$0xff] %vm41, %v30
  %65 = vst.msk [vmem:[%s40 + $0x111] sm:$0xff] %vm41, %v31
  %66 = vst.msk [vmem:[%s40 + $0x121] sm:$0xff] %vm41, %v32
  %67 = vst.msk [vmem:[%s40 + $0x129] sm:$0xff] %vm41, %v33
  %68 = vst.msk [vmem:[%s40 + $0x139] sm:$0xff] %vm41, %v34
  %69 = vst.msk [vmem:[%s40 + $0x141] sm:$0xff] %vm41, %v35
  %70 = vst.msk [vmem:[%s40 + $0x151] sm:$0xff] %vm41, %v36
  %71 = vst.msk [vmem:[%s40 + $0x159] sm:$0xff] %vm41, %v37
  %72 = vst.msk [vmem:[%s40 + $0x169] sm:$0xff] %vm41, %v38
  %73 = vst.msk [vmem:[%s40 + $0x171] sm:$0xff] %vm41, %v39
  %v74 = vld [vmem:[%s0 + $0x1] sm:$0x1]
  %v75 = vld [vmem:[%s0 + $0x11] sm:$0x1]
  %v76 = vld [vmem:[%s0 + $0x21] sm:$0x1]
  %v77 = vld [vmem:[%s0 + $0x31] sm:$0x1]
  %v78 = vld [vmem:[%s0 + $0x41] sm:$0x1]
  %v79 = vld [vmem:[%s0 + $0x51] sm:$0x1]
  %v80 = vld [vmem:[%s0 + $0x61] sm:$0x1]
  %v81 = vld [vmem:[%s0 + $0x71] sm:$0x1]
  %v82 = vld [vmem:[%s0 + $0x81] sm:$0x1]
  %v83 = vld [vmem:[%s0 + $0x91] sm:$0x1]
  %v84 = vld [vmem:[%s0 + $0xa1] sm:$0x1]
  %v85 = vld [vmem:[%s0 + $0xb1] sm:$0x1]
  %v86 = vld [vmem:[%s0 + $0xc1] sm:$0x1]
  %v87 = vld [vmem:[%s0 + $0xd1] sm:$0x1]
  %v88 = vld [vmem:[%s0 + $0xe1] sm:$0x1]
  %v89 = vld [vmem:[%s0 + $0xf1] sm:$0x1]
  %vm90 = vcmask 57344
  %91 = vst.msk [vmem:[%s40] sm:$0x1] %vm90, %v74
  %92 = vst.msk [vmem:[%s40 + $0x18] sm:$0x1] %vm90, %v75
  %93 = vst.msk [vmem:[%s40 + $0x30] sm:$0x1] %vm90, %v76
  %94 = vst.msk [vmem:[%s40 + $0x48] sm:$0x1] %vm90, %v77
  %95 = vst.msk [vmem:[%s40 + $0x60] sm:$0x1] %vm90, %v78
  %96 = vst.msk [vmem:[%s40 + $0x78] sm:$0x1] %vm90, %v79
  %97 = vst.msk [vmem:[%s40 + $0x90] sm:$0x1] %vm90, %v80
  %98 = vst.msk [vmem:[%s40 + $0xa8] sm:$0x1] %vm90, %v81
  %99 = vst.msk [vmem:[%s40 + $0xc0] sm:$0x1] %vm90, %v82
  %100 = vst.msk [vmem:[%s40 + $0xd8] sm:$0x1] %vm90, %v83
  %101 = vst.msk [vmem:[%s40 + $0xf0] sm:$0x1] %vm90, %v84
  %102 = vst.msk [vmem:[%s40 + $0x108] sm:$0x1] %vm90, %v85
  %103 = vst.msk [vmem:[%s40 + $0x120] sm:$0x1] %vm90, %v86
  %104 = vst.msk [vmem:[%s40 + $0x138] sm:$0x1] %vm90, %v87
  %105 = vst.msk [vmem:[%s40 + $0x150] sm:$0x1] %vm90, %v88
  %106 = vst.msk [vmem:[%s40 + $0x168] sm:$0x1] %vm90, %v89
  %v107 = vld [vmem:[%s0 + $0xe] sm:$0x1]
  %v108 = vld [vmem:[%s0 + $0x1e] sm:$0x1]
  %v109 = vld [vmem:[%s0 + $0x2e] sm:$0x1]
  %v110 = vld [vmem:[%s0 + $0x3e] sm:$0x1]
  %v111 = vld [vmem:[%s0 + $0x4e] sm:$0x1]
  %v112 = vld [vmem:[%s0 + $0x5e] sm:$0x1]
  %v113 = vld [vmem:[%s0 + $0x6e] sm:$0x1]
  %v114 = vld [vmem:[%s0 + $0x7e] sm:$0x1]
  %v115 = vld [vmem:[%s0 + $0x8e] sm:$0x1]
  %v116 = vld [vmem:[%s0 + $0x9e] sm:$0x1]
  %v117 = vld [vmem:[%s0 + $0xae] sm:$0x1]
  %v118 = vld [vmem:[%s0 + $0xbe] sm:$0x1]
  %v119 = vld [vmem:[%s0 + $0xce] sm:$0x1]
  %v120 = vld [vmem:[%s0 + $0xde] sm:$0x1]
  %v121 = vld [vmem:[%s0 + $0xee] sm:$0x1]
  %v122 = vld [vmem:[%s0 + $0xfe] sm:$0x1]
  %123 = vst.msk [vmem:[%s40 + $0x11] sm:$0x1] %vm90, %v107
  %124 = vst.msk [vmem:[%s40 + $0x29] sm:$0x1] %vm90, %v108
  %125 = vst.msk [vmem:[%s40 + $0x41] sm:$0x1] %vm90, %v109
  %126 = vst.msk [vmem:[%s40 + $0x59] sm:$0x1] %vm90, %v110
  %127 = vst.msk [vmem:[%s40 + $0x71] sm:$0x1] %vm90, %v111
  %128 = vst.msk [vmem:[%s40 + $0x89] sm:$0x1] %vm90, %v112
  %129 = vst.msk [vmem:[%s40 + $0xa1] sm:$0x1] %vm90, %v113
  %130 = vst.msk [vmem:[%s40 + $0xb9] sm:$0x1] %vm90, %v114
  %131 = vst.msk [vmem:[%s40 + $0xd1] sm:$0x1] %vm90, %v115
  %132 = vst.msk [vmem:[%s40 + $0xe9] sm:$0x1] %vm90, %v116
  %133 = vst.msk [vmem:[%s40 + $0x101] sm:$0x1] %vm90, %v117
  %134 = vst.msk [vmem:[%s40 + $0x119] sm:$0x1] %vm90, %v118
  %135 = vst.msk [vmem:[%s40 + $0x131] sm:$0x1] %vm90, %v119
  %136 = vst.msk [vmem:[%s40 + $0x149] sm:$0x1] %vm90, %v120
  %137 = vst.msk [vmem:[%s40 + $0x161] sm:$0x1] %vm90, %v121
  %138 = vst.msk [vmem:[%s40 + $0x179] sm:$0x1] %vm90, %v122
  %s139 = scalar_lea.vmem [#allocation2], 48
  %v140 = vld [vmem:[%s139] sm:$0xff]
  %v141 = vld [vmem:[%s139 + $0x8] sm:$0xff]
  %v142 = vld [vmem:[%s139 + $0x10] sm:$0x3]
  %143 = vst.msk [vmem:[#allocation2] sm:$0xff] %vm41, %v140
  %144 = vst.msk [vmem:[#allocation2 + $0x8] sm:$0xff] %vm41, %v141
  %vm145 = vcmask 58368
  %146 = vst.msk [vmem:[#allocation2 + $0x10] sm:$0x3] %vm145, %v142
  %s147 = scalar_lea.vmem [#allocation2], 360
  %v148 = vld [vmem:[%s147] sm:$0xff]
  %v149 = vld [vmem:[%s147 + $0x8] sm:$0xff]
  %v150 = vld [vmem:[%s147 + $0x10] sm:$0x3]
  %s151 = scalar_lea.vmem [#allocation2], 408
  %152 = vst.msk [vmem:[%s151] sm:$0xff] %vm41, %v148
  %153 = vst.msk [vmem:[%s151 + $0x8] sm:$0xff] %vm41, %v149
  %154 = vst.msk [vmem:[%s151 + $0x10] sm:$0x3] %vm145, %v150
  %v155 = vld [vmem:[#allocation2] sm:$0xff]
  %v156 = vld [vmem:[#allocation2 + $0x8] sm:$0xff]
  %v157 = vld [vmem:[#allocation2 + $0x10] sm:$0x3]
  %v158 = vld [vmem:[#allocation2 + $0x18] sm:$0xff]
  %v159 = vld [vmem:[#allocation2 + $0x20] sm:$0xff]
  %v160 = vld [vmem:[#allocation2 + $0x28] sm:$0x3]
  %v161 = vld [vmem:[#allocation2 + $0x30] sm:$0xff]
  %v162 = vld [vmem:[#allocation2 + $0x38] sm:$0xff]
  %v163 = vld [vmem:[#allocation2 + $0x40] sm:$0x3]
  %v164 = vld [vmem:[#allocation2 + $0x48] sm:$0xff]
  %v165 = vld [vmem:[#allocation2 + $0x50] sm:$0xff]
  %v166 = vld [vmem:[#allocation2 + $0x58] sm:$0x3]
  %v167 = vld [vmem:[#allocation2 + $0x60] sm:$0xff]
  %v168 = vld [vmem:[#allocation2 + $0x68] sm:$0xff]
  %v169 = vld [vmem:[#allocation2 + $0x70] sm:$0x3]
  %v170 = vld [vmem:[#allocation2 + $0x78] sm:$0xff]
  %v171 = vld [vmem:[#allocation2 + $0x80] sm:$0xff]
  %v172 = vld [vmem:[#allocation2 + $0x88] sm:$0x3]
  %v173 = vld [vmem:[#allocation2 + $0x90] sm:$0xff]
  %v174 = vld [vmem:[#allocation2 + $0x98] sm:$0xff]
  %v175 = vld [vmem:[#allocation2 + $0xa0] sm:$0x3]
  %v176 = vld [vmem:[#allocation2 + $0xa8] sm:$0xff]
  %v177 = vld [vmem:[#allocation2 + $0xb0] sm:$0xff]
  %v178 = vld [vmem:[#allocation2 + $0xb8] sm:$0x3]
  %v179 = vld [vmem:[#allocation2 + $0xc0] sm:$0xff]
  %v180 = vld [vmem:[#allocation2 + $0xc8] sm:$0xff]
  %v181 = vld [vmem:[#allocation2 + $0xd0] sm:$0x3]
  %v182 = vld [vmem:[#allocation2 + $0xd8] sm:$0xff]
  %v183 = vld [vmem:[#allocation2 + $0xe0] sm:$0xff]
  %v184 = vld [vmem:[#allocation2 + $0xe8] sm:$0x3]
  %v185 = vld [vmem:[#allocation2 + $0xf0] sm:$0xff]
  %v186 = vld [vmem:[#allocation2 + $0xf8] sm:$0xff]
  %v187 = vld [vmem:[#allocation2 + $0x100] sm:$0x3]
  %v188 = vld [vmem:[#allocation2 + $0x108] sm:$0xff]
  %v189 = vld [vmem:[#allocation2 + $0x110] sm:$0xff]
  %v190 = vld [vmem:[#allocation2 + $0x118] sm:$0x3]
  %v191 = vld [vmem:[#allocation2 + $0x120] sm:$0xff]
  %v192 = vld [vmem:[#allocation2 + $0x128] sm:$0xff]
  %v193 = vld [vmem:[#allocation2 + $0x130] sm:$0x3]
  %v194 = vld [vmem:[#allocation2 + $0x138] sm:$0xff]
  %v195 = vld [vmem:[#allocation2 + $0x140] sm:$0xff]
  %v196 = vld [vmem:[#allocation2 + $0x148] sm:$0x3]
  %v197 = vld [vmem:[#allocation2 + $0x150] sm:$0xff]
  %v198 = vld [vmem:[#allocation2 + $0x158] sm:$0xff]
  %v199 = vld [vmem:[#allocation2 + $0x160] sm:$0x3]
  %v200 = vld [vmem:[#allocation2 + $0x168] sm:$0xff]
  %v201 = vld [vmem:[#allocation2 + $0x170] sm:$0xff]
  %v202 = vld [vmem:[#allocation2 + $0x178] sm:$0x3]
  %v203 = vld [vmem:[%s40] sm:$0xff]
  %v204 = vld [vmem:[%s40 + $0x8] sm:$0xff]
  %v205 = vld [vmem:[%s40 + $0x10] sm:$0x3]
  %v206 = vld [vmem:[%s40 + $0x18] sm:$0xff]
  %v207 = vld [vmem:[%s40 + $0x20] sm:$0xff]
  %v208 = vld [vmem:[%s40 + $0x28] sm:$0x3]
  %v209 = vld [vmem:[%s40 + $0x30] sm:$0xff]
  %v210 = vld [vmem:[%s40 + $0x38] sm:$0xff]
  %v211 = vld [vmem:[%s40 + $0x40] sm:$0x3]
  %v212 = vld [vmem:[%s40 + $0x48] sm:$0xff]
  %v213 = vld [vmem:[%s40 + $0x50] sm:$0xff]
  %v214 = vld [vmem:[%s40 + $0x58] sm:$0x3]
  %v215 = vld [vmem:[%s40 + $0x60] sm:$0xff]
  %v216 = vld [vmem:[%s40 + $0x68] sm:$0xff]
  %v217 = vld [vmem:[%s40 + $0x70] sm:$0x3]
  %v218 = vld [vmem:[%s40 + $0x78] sm:$0xff]
  %v219 = vld [vmem:[%s40 + $0x80] sm:$0xff]
  %v220 = vld [vmem:[%s40 + $0x88] sm:$0x3]
  %v221 = vld [vmem:[%s40 + $0x90] sm:$0xff]
  %v222 = vld [vmem:[%s40 + $0x98] sm:$0xff]
  %v223 = vld [vmem:[%s40 + $0xa0] sm:$0x3]
  %v224 = vld [vmem:[%s40 + $0xa8] sm:$0xff]
  %v225 = vld [vmem:[%s40 + $0xb0] sm:$0xff]
  %v226 = vld [vmem:[%s40 + $0xb8] sm:$0x3]
  %v227 = vld [vmem:[%s40 + $0xc0] sm:$0xff]
  %v228 = vld [vmem:[%s40 + $0xc8] sm:$0xff]
  %v229 = vld [vmem:[%s40 + $0xd0] sm:$0x3]
  %v230 = vld [vmem:[%s40 + $0xd8] sm:$0xff]
  %v231 = vld [vmem:[%s40 + $0xe0] sm:$0xff]
  %v232 = vld [vmem:[%s40 + $0xe8] sm:$0x3]
  %v233 = vld [vmem:[%s40 + $0xf0] sm:$0xff]
  %v234 = vld [vmem:[%s40 + $0xf8] sm:$0xff]
  %v235 = vld [vmem:[%s40 + $0x100] sm:$0x3]
  %v236 = vld [vmem:[%s40 + $0x108] sm:$0xff]
  %v237 = vld [vmem:[%s40 + $0x110] sm:$0xff]
  %v238 = vld [vmem:[%s40 + $0x118] sm:$0x3]
  %v239 = vld [vmem:[%s40 + $0x120] sm:$0xff]
  %v240 = vld [vmem:[%s40 + $0x128] sm:$0xff]
  %v241 = vld [vmem:[%s40 + $0x130] sm:$0x3]
  %v242 = vld [vmem:[%s40 + $0x138] sm:$0xff]
  %v243 = vld [vmem:[%s40 + $0x140] sm:$0xff]
  %v244 = vld [vmem:[%s40 + $0x148] sm:$0x3]
  %v245 = vld [vmem:[%s40 + $0x150] sm:$0xff]
  %v246 = vld [vmem:[%s40 + $0x158] sm:$0xff]
  %v247 = vld [vmem:[%s40 + $0x160] sm:$0x3]
  %v248 = vld [vmem:[%s40 + $0x168] sm:$0xff]
  %v249 = vld [vmem:[%s40 + $0x170] sm:$0xff]
  %v250 = vld [vmem:[%s40 + $0x178] sm:$0x3]
  %v251 = vld [vmem:[%s139] sm:$0xff]
  %v252 = vld [vmem:[%s139 + $0x8] sm:$0xff]
  %v253 = vld [vmem:[%s139 + $0x10] sm:$0x3]
  %v254 = vld [vmem:[%s139 + $0x18] sm:$0xff]
  %v255 = vld [vmem:[%s139 + $0x20] sm:$0xff]
  %v256 = vld [vmem:[%s139 + $0x28] sm:$0x3]
  %v257 = vld [vmem:[%s139 + $0x30] sm:$0xff]
  %v258 = vld [vmem:[%s139 + $0x38] sm:$0xff]
  %v259 = vld [vmem:[%s139 + $0x40] sm:$0x3]
  %v260 = vld [vmem:[%s139 + $0x48] sm:$0xff]
  %v261 = vld [vmem:[%s139 + $0x50] sm:$0xff]
  %v262 = vld [vmem:[%s139 + $0x58] sm:$0x3]
  %v263 = vld [vmem:[%s139 + $0x60] sm:$0xff]
  %v264 = vld [vmem:[%s139 + $0x68] sm:$0xff]
  %v265 = vld [vmem:[%s139 + $0x70] sm:$0x3]
  %v266 = vld [vmem:[%s139 + $0x78] sm:$0xff]
  %v267 = vld [vmem:[%s139 + $0x80] sm:$0xff]
  %v268 = vld [vmem:[%s139 + $0x88] sm:$0x3]
  %v269 = vld [vmem:[%s139 + $0x90] sm:$0xff]
  %v270 = vld [vmem:[%s139 + $0x98] sm:$0xff]
  %v271 = vld [vmem:[%s139 + $0xa0] sm:$0x3]
  %v272 = vld [vmem:[%s139 + $0xa8] sm:$0xff]
  %v273 = vld [vmem:[%s139 + $0xb0] sm:$0xff]
  %v274 = vld [vmem:[%s139 + $0xb8] sm:$0x3]
  %v275 = vld [vmem:[%s139 + $0xc0] sm:$0xff]
  %v276 = vld [vmem:[%s139 + $0xc8] sm:$0xff]
  %v277 = vld [vmem:[%s139 + $0xd0] sm:$0x3]
  %v278 = vld [vmem:[%s139 + $0xd8] sm:$0xff]
  %v279 = vld [vmem:[%s139 + $0xe0] sm:$0xff]
  %v280 = vld [vmem:[%s139 + $0xe8] sm:$0x3]
  %v281 = vld [vmem:[%s139 + $0xf0] sm:$0xff]
  %v282 = vld [vmem:[%s139 + $0xf8] sm:$0xff]
  %v283 = vld [vmem:[%s139 + $0x100] sm:$0x3]
  %v284 = vld [vmem:[%s139 + $0x108] sm:$0xff]
  %v285 = vld [vmem:[%s139 + $0x110] sm:$0xff]
  %v286 = vld [vmem:[%s139 + $0x118] sm:$0x3]
  %v287 = vld [vmem:[%s139 + $0x120] sm:$0xff]
  %v288 = vld [vmem:[%s139 + $0x128] sm:$0xff]
  %v289 = vld [vmem:[%s139 + $0x130] sm:$0x3]
  %v290 = vld [vmem:[%s139 + $0x138] sm:$0xff]
  %v291 = vld [vmem:[%s139 + $0x140] sm:$0xff]
  %v292 = vld [vmem:[%s139 + $0x148] sm:$0x3]
  %v293 = vld [vmem:[%s139 + $0x150] sm:$0xff]
  %v294 = vld [vmem:[%s139 + $0x158] sm:$0xff]
  %v295 = vld [vmem:[%s139 + $0x160] sm:$0x3]
  %v296 = vld [vmem:[%s139 + $0x168] sm:$0xff]
  %v297 = vld [vmem:[%s139 + $0x170] sm:$0xff]
  %v298 = vld [vmem:[%s139 + $0x178] sm:$0x3]
  %v299 = vmin.f32 %v155, %v203
  %v300 = vmin.f32 %v156, %v204
  %v301 = vmin.f32 %v157, %v205
  %v302 = vmin.f32 %v158, %v206
  %v303 = vmin.f32 %v159, %v207
  %v304 = vmin.f32 %v160, %v208
  %v305 = vmin.f32 %v161, %v209
  %v306 = vmin.f32 %v162, %v210
  %v307 = vmin.f32 %v163, %v211
  %v308 = vmin.f32 %v164, %v212
  %v309 = vmin.f32 %v165, %v213
  %v310 = vmin.f32 %v166, %v214
  %v311 = vmin.f32 %v167, %v215
  %v312 = vmin.f32 %v168, %v216
  %v313 = vmin.f32 %v169, %v217
  %v314 = vmin.f32 %v170, %v218
  %v315 = vmin.f32 %v171, %v219
  %v316 = vmin.f32 %v172, %v220
  %v317 = vmin.f32 %v173, %v221
  %v318 = vmin.f32 %v174, %v222
  %v319 = vmin.f32 %v175, %v223
  %v320 = vmin.f32 %v176, %v224
  %v321 = vmin.f32 %v177, %v225
  %v322 = vmin.f32 %v178, %v226
  %v323 = vmin.f32 %v179, %v227
  %v324 = vmin.f32 %v180, %v228
  %v325 = vmin.f32 %v181, %v229
  %v326 = vmin.f32 %v182, %v230
  %v327 = vmin.f32 %v183, %v231
  %v328 = vmin.f32 %v184, %v232
  %v329 = vmin.f32 %v185, %v233
  %v330 = vmin.f32 %v186, %v234
  %v331 = vmin.f32 %v187, %v235
  %v332 = vmin.f32 %v188, %v236
  %v333 = vmin.f32 %v189, %v237
  %v334 = vmin.f32 %v190, %v238
  %v335 = vmin.f32 %v191, %v239
  %v336 = vmin.f32 %v192, %v240
  %v337 = vmin.f32 %v193, %v241
  %v338 = vmin.f32 %v194, %v242
  %v339 = vmin.f32 %v195, %v243
  %v340 = vmin.f32 %v196, %v244
  %v341 = vmin.f32 %v197, %v245
  %v342 = vmin.f32 %v198, %v246
  %v343 = vmin.f32 %v199, %v247
  %v344 = vmin.f32 %v200, %v248
  %v345 = vmin.f32 %v201, %v249
  %v346 = vmin.f32 %v202, %v250
  %v347 = vmax.f32 %v155, %v203
  %v348 = vmax.f32 %v156, %v204
  %v349 = vmax.f32 %v157, %v205
  %v350 = vmax.f32 %v158, %v206
  %v351 = vmax.f32 %v159, %v207
  %v352 = vmax.f32 %v160, %v208
  %v353 = vmax.f32 %v161, %v209
  %v354 = vmax.f32 %v162, %v210
  %v355 = vmax.f32 %v163, %v211
  %v356 = vmax.f32 %v164, %v212
  %v357 = vmax.f32 %v165, %v213
  %v358 = vmax.f32 %v166, %v214
  %v359 = vmax.f32 %v167, %v215
  %v360 = vmax.f32 %v168, %v216
  %v361 = vmax.f32 %v169, %v217
  %v362 = vmax.f32 %v170, %v218
  %v363 = vmax.f32 %v171, %v219
  %v364 = vmax.f32 %v172, %v220
  %v365 = vmax.f32 %v173, %v221
  %v366 = vmax.f32 %v174, %v222
  %v367 = vmax.f32 %v175, %v223
  %v368 = vmax.f32 %v176, %v224
  %v369 = vmax.f32 %v177, %v225
  %v370 = vmax.f32 %v178, %v226
  %v371 = vmax.f32 %v179, %v227
  %v372 = vmax.f32 %v180, %v228
  %v373 = vmax.f32 %v181, %v229
  %v374 = vmax.f32 %v182, %v230
  %v375 = vmax.f32 %v183, %v231
  %v376 = vmax.f32 %v184, %v232
  %v377 = vmax.f32 %v185, %v233
  %v378 = vmax.f32 %v186, %v234
  %v379 = vmax.f32 %v187, %v235
  %v380 = vmax.f32 %v188, %v236
  %v381 = vmax.f32 %v189, %v237
  %v382 = vmax.f32 %v190, %v238
  %v383 = vmax.f32 %v191, %v239
  %v384 = vmax.f32 %v192, %v240
  %v385 = vmax.f32 %v193, %v241
  %v386 = vmax.f32 %v194, %v242
  %v387 = vmax.f32 %v195, %v243
  %v388 = vmax.f32 %v196, %v244
  %v389 = vmax.f32 %v197, %v245
  %v390 = vmax.f32 %v198, %v246
  %v391 = vmax.f32 %v199, %v247
  %v392 = vmax.f32 %v200, %v248
  %v393 = vmax.f32 %v201, %v249
  %v394 = vmax.f32 %v202, %v250
  %v395 = vmin.f32 %v347, %v251
  %v396 = vmin.f32 %v348, %v252
  %v397 = vmin.f32 %v349, %v253
  %v398 = vmin.f32 %v350, %v254
  %v399 = vmin.f32 %v351, %v255
  %v400 = vmin.f32 %v352, %v256
  %v401 = vmin.f32 %v353, %v257
  %v402 = vmin.f32 %v354, %v258
  %v403 = vmin.f32 %v355, %v259
  %v404 = vmin.f32 %v356, %v260
  %v405 = vmin.f32 %v357, %v261
  %v406 = vmin.f32 %v358, %v262
  %v407 = vmin.f32 %v359, %v263
  %v408 = vmin.f32 %v360, %v264
  %v409 = vmin.f32 %v361, %v265
  %v410 = vmin.f32 %v362, %v266
  %v411 = vmin.f32 %v363, %v267
  %v412 = vmin.f32 %v364, %v268
  %v413 = vmin.f32 %v365, %v269
  %v414 = vmin.f32 %v366, %v270
  %v415 = vmin.f32 %v367, %v271
  %v416 = vmin.f32 %v368, %v272
  %v417 = vmin.f32 %v369, %v273
  %v418 = vmin.f32 %v370, %v274
  %v419 = vmin.f32 %v371, %v275
  %v420 = vmin.f32 %v372, %v276
  %v421 = vmin.f32 %v373, %v277
  %v422 = vmin.f32 %v374, %v278
  %v423 = vmin.f32 %v375, %v279
  %v424 = vmin.f32 %v376, %v280
  %v425 = vmin.f32 %v377, %v281
  %v426 = vmin.f32 %v378, %v282
  %v427 = vmin.f32 %v379, %v283
  %v428 = vmin.f32 %v380, %v284
  %v429 = vmin.f32 %v381, %v285
  %v430 = vmin.f32 %v382, %v286
  %v431 = vmin.f32 %v383, %v287
  %v432 = vmin.f32 %v384, %v288
  %v433 = vmin.f32 %v385, %v289
  %v434 = vmin.f32 %v386, %v290
  %v435 = vmin.f32 %v387, %v291
  %v436 = vmin.f32 %v388, %v292
  %v437 = vmin.f32 %v389, %v293
  %v438 = vmin.f32 %v390, %v294
  %v439 = vmin.f32 %v391, %v295
  %v440 = vmin.f32 %v392, %v296
  %v441 = vmin.f32 %v393, %v297
  %v442 = vmin.f32 %v394, %v298
  %v443 = vmax.f32 %v347, %v251
  %v444 = vmax.f32 %v348, %v252
  %v445 = vmax.f32 %v349, %v253
  %v446 = vmax.f32 %v350, %v254
  %v447 = vmax.f32 %v351, %v255
  %v448 = vmax.f32 %v352, %v256
  %v449 = vmax.f32 %v353, %v257
  %v450 = vmax.f32 %v354, %v258
  %v451 = vmax.f32 %v355, %v259
  %v452 = vmax.f32 %v356, %v260
  %v453 = vmax.f32 %v357, %v261
  %v454 = vmax.f32 %v358, %v262
  %v455 = vmax.f32 %v359, %v263
  %v456 = vmax.f32 %v360, %v264
  %v457 = vmax.f32 %v361, %v265
  %v458 = vmax.f32 %v362, %v266
  %v459 = vmax.f32 %v363, %v267
  %v460 = vmax.f32 %v364, %v268
  %v461 = vmax.f32 %v365, %v269
  %v462 = vmax.f32 %v366, %v270
  %v463 = vmax.f32 %v367, %v271
  %v464 = vmax.f32 %v368, %v272
  %v465 = vmax.f32 %v369, %v273
  %v466 = vmax.f32 %v370, %v274
  %v467 = vmax.f32 %v371, %v275
  %v468 = vmax.f32 %v372, %v276
  %v469 = vmax.f32 %v373, %v277
  %v470 = vmax.f32 %v374, %v278
  %v471 = vmax.f32 %v375, %v279
  %v472 = vmax.f32 %v376, %v280
  %v473 = vmax.f32 %v377, %v281
  %v474 = vmax.f32 %v378, %v282
  %v475 = vmax.f32 %v379, %v283
  %v476 = vmax.f32 %v380, %v284
  %v477 = vmax.f32 %v381, %v285
  %v478 = vmax.f32 %v382, %v286
  %v479 = vmax.f32 %v383, %v287
  %v480 = vmax.f32 %v384, %v288
  %v481 = vmax.f32 %v385, %v289
  %v482 = vmax.f32 %v386, %v290
  %v483 = vmax.f32 %v387, %v291
  %v484 = vmax.f32 %v388, %v292
  %v485 = vmax.f32 %v389, %v293
  %v486 = vmax.f32 %v390, %v294
  %v487 = vmax.f32 %v391, %v295
  %v488 = vmax.f32 %v392, %v296
  %v489 = vmax.f32 %v393, %v297
  %v490 = vmax.f32 %v394, %v298
  %v491 = vmin.f32 %v299, %v395
  %v492 = vmin.f32 %v300, %v396
  %v493 = vmin.f32 %v301, %v397
  %v494 = vmin.f32 %v302, %v398
  %v495 = vmin.f32 %v303, %v399
  %v496 = vmin.f32 %v304, %v400
  %v497 = vmin.f32 %v305, %v401
  %v498 = vmin.f32 %v306, %v402
  %v499 = vmin.f32 %v307, %v403
  %v500 = vmin.f32 %v308, %v404
  %v501 = vmin.f32 %v309, %v405
  %v502 = vmin.f32 %v310, %v406
  %v503 = vmin.f32 %v311, %v407
  %v504 = vmin.f32 %v312, %v408
  %v505 = vmin.f32 %v313, %v409
  %v506 = vmin.f32 %v314, %v410
  %v507 = vmin.f32 %v315, %v411
  %v508 = vmin.f32 %v316, %v412
  %v509 = vmin.f32 %v317, %v413
  %v510 = vmin.f32 %v318, %v414
  %v511 = vmin.f32 %v319, %v415
  %v512 = vmin.f32 %v320, %v416
  %v513 = vmin.f32 %v321, %v417
  %v514 = vmin.f32 %v322, %v418
  %v515 = vmin.f32 %v323, %v419
  %v516 = vmin.f32 %v324, %v420
  %v517 = vmin.f32 %v325, %v421
  %v518 = vmin.f32 %v326, %v422
  %v519 = vmin.f32 %v327, %v423
  %v520 = vmin.f32 %v328, %v424
  %v521 = vmin.f32 %v329, %v425
  %v522 = vmin.f32 %v330, %v426
  %v523 = vmin.f32 %v331, %v427
  %v524 = vmin.f32 %v332, %v428
  %v525 = vmin.f32 %v333, %v429
  %v526 = vmin.f32 %v334, %v430
  %v527 = vmin.f32 %v335, %v431
  %v528 = vmin.f32 %v336, %v432
  %v529 = vmin.f32 %v337, %v433
  %v530 = vmin.f32 %v338, %v434
  %v531 = vmin.f32 %v339, %v435
  %v532 = vmin.f32 %v340, %v436
  %v533 = vmin.f32 %v341, %v437
  %v534 = vmin.f32 %v342, %v438
  %v535 = vmin.f32 %v343, %v439
  %v536 = vmin.f32 %v344, %v440
  %v537 = vmin.f32 %v345, %v441
  %v538 = vmin.f32 %v346, %v442
  %v539 = vmax.f32 %v299, %v395
  %v540 = vmax.f32 %v300, %v396
  %v541 = vmax.f32 %v301, %v397
  %v542 = vmax.f32 %v302, %v398
  %v543 = vmax.f32 %v303, %v399
  %v544 = vmax.f32 %v304, %v400
  %v545 = vmax.f32 %v305, %v401
  %v546 = vmax.f32 %v306, %v402
  %v547 = vmax.f32 %v307, %v403
  %v548 = vmax.f32 %v308, %v404
  %v549 = vmax.f32 %v309, %v405
  %v550 = vmax.f32 %v310, %v406
  %v551 = vmax.f32 %v311, %v407
  %v552 = vmax.f32 %v312, %v408
  %v553 = vmax.f32 %v313, %v409
  %v554 = vmax.f32 %v314, %v410
  %v555 = vmax.f32 %v315, %v411
  %v556 = vmax.f32 %v316, %v412
  %v557 = vmax.f32 %v317, %v413
  %v558 = vmax.f32 %v318, %v414
  %v559 = vmax.f32 %v319, %v415
  %v560 = vmax.f32 %v320, %v416
  %v561 = vmax.f32 %v321, %v417
  %v562 = vmax.f32 %v322, %v418
  %v563 = vmax.f32 %v323, %v419
  %v564 = vmax.f32 %v324, %v420
  %v565 = vmax.f32 %v325, %v421
  %v566 = vmax.f32 %v326, %v422
  %v567 = vmax.f32 %v327, %v423
  %v568 = vmax.f32 %v328, %v424
  %v569 = vmax.f32 %v329, %v425
  %v570 = vmax.f32 %v330, %v426
  %v571 = vmax.f32 %v331, %v427
  %v572 = vmax.f32 %v332, %v428
  %v573 = vmax.f32 %v333, %v429
  %v574 = vmax.f32 %v334, %v430
  %v575 = vmax.f32 %v335, %v431
  %v576 = vmax.f32 %v336, %v432
  %v577 = vmax.f32 %v337, %v433
  %v578 = vmax.f32 %v338, %v434
  %v579 = vmax.f32 %v339, %v435
  %v580 = vmax.f32 %v340, %v436
  %v581 = vmax.f32 %v341, %v437
  %v582 = vmax.f32 %v342, %v438
  %v583 = vmax.f32 %v343, %v439
  %v584 = vmax.f32 %v344, %v440
  %v585 = vmax.f32 %v345, %v441
  %v586 = vmax.f32 %v346, %v442
  %vm635 = vcmask 1046528
  %v636 = vrot.slane %v491, 1
  %v637 = vrot.slane %v492, 1
  %v638 = vsel %vm635, %v636, %v637
  %v639 = vrot.slane %v493, 1
  %v640 = vsel %vm635, %v637, %v639
  %v641 = vrot.slane %v494, 1
  %v642 = vrot.slane %v495, 1
  %v643 = vsel %vm635, %v641, %v642
  %v644 = vrot.slane %v496, 1
  %v645 = vsel %vm635, %v642, %v644
  %v646 = vrot.slane %v497, 1
  %v647 = vrot.slane %v498, 1
  %v648 = vsel %vm635, %v646, %v647
  %v649 = vrot.slane %v499, 1
  %v650 = vsel %vm635, %v647, %v649
  %v651 = vrot.slane %v500, 1
  %v652 = vrot.slane %v501, 1
  %v653 = vsel %vm635, %v651, %v652
  %v654 = vrot.slane %v502, 1
  %v655 = vsel %vm635, %v652, %v654
  %v656 = vrot.slane %v503, 1
  %v657 = vrot.slane %v504, 1
  %v658 = vsel %vm635, %v656, %v657
  %v659 = vrot.slane %v505, 1
  %v660 = vsel %vm635, %v657, %v659
  %v661 = vrot.slane %v506, 1
  %v662 = vrot.slane %v507, 1
  %v663 = vsel %vm635, %v661, %v662
  %v664 = vrot.slane %v508, 1
  %v665 = vsel %vm635, %v662, %v664
  %v666 = vrot.slane %v509, 1
  %v667 = vrot.slane %v510, 1
  %v668 = vsel %vm635, %v666, %v667
  %v669 = vrot.slane %v511, 1
  %v670 = vsel %vm635, %v667, %v669
  %v671 = vrot.slane %v512, 1
  %v672 = vrot.slane %v513, 1
  %v673 = vsel %vm635, %v671, %v672
  %v674 = vrot.slane %v514, 1
  %v675 = vsel %vm635, %v672, %v674
  %v676 = vrot.slane %v515, 1
  %v677 = vrot.slane %v516, 1
  %v678 = vsel %vm635, %v676, %v677
  %v679 = vrot.slane %v517, 1
  %v680 = vsel %vm635, %v677, %v679
  %v681 = vrot.slane %v518, 1
  %v682 = vrot.slane %v519, 1
  %v683 = vsel %vm635, %v681, %v682
  %v684 = vrot.slane %v520, 1
  %v685 = vsel %vm635, %v682, %v684
  %v686 = vrot.slane %v521, 1
  %v687 = vrot.slane %v522, 1
  %v688 = vsel %vm635, %v686, %v687
  %v689 = vrot.slane %v523, 1
  %v690 = vsel %vm635, %v687, %v689
  %v691 = vrot.slane %v524, 1
  %v692 = vrot.slane %v525, 1
  %v693 = vsel %vm635, %v691, %v692
  %v694 = vrot.slane %v526, 1
  %v695 = vsel %vm635, %v692, %v694
  %v696 = vrot.slane %v527, 1
  %v697 = vrot.slane %v528, 1
  %v698 = vsel %vm635, %v696, %v697
  %v699 = vrot.slane %v529, 1
  %v700 = vsel %vm635, %v697, %v699
  %v701 = vrot.slane %v530, 1
  %v702 = vrot.slane %v531, 1
  %v703 = vsel %vm635, %v701, %v702
  %v704 = vrot.slane %v532, 1
  %v705 = vsel %vm635, %v702, %v704
  %v706 = vrot.slane %v533, 1
  %v707 = vrot.slane %v534, 1
  %v708 = vsel %vm635, %v706, %v707
  %v709 = vrot.slane %v535, 1
  %v710 = vsel %vm635, %v707, %v709
  %v711 = vrot.slane %v536, 1
  %v712 = vrot.slane %v537, 1
  %v713 = vsel %vm635, %v711, %v712
  %v714 = vrot.slane %v538, 1
  %v715 = vsel %vm635, %v712, %v714
  %v748 = vmax.f32 %v491, %v638
  %v749 = vmax.f32 %v492, %v640
  %v750 = vmax.f32 %v494, %v643
  %v751 = vmax.f32 %v495, %v645
  %v752 = vmax.f32 %v497, %v648
  %v753 = vmax.f32 %v498, %v650
  %v754 = vmax.f32 %v500, %v653
  %v755 = vmax.f32 %v501, %v655
  %v756 = vmax.f32 %v503, %v658
  %v757 = vmax.f32 %v504, %v660
  %v758 = vmax.f32 %v506, %v663
  %v759 = vmax.f32 %v507, %v665
  %v760 = vmax.f32 %v509, %v668
  %v761 = vmax.f32 %v510, %v670
  %v762 = vmax.f32 %v512, %v673
  %v763 = vmax.f32 %v513, %v675
  %v764 = vmax.f32 %v515, %v678
  %v765 = vmax.f32 %v516, %v680
  %v766 = vmax.f32 %v518, %v683
  %v767 = vmax.f32 %v519, %v685
  %v768 = vmax.f32 %v521, %v688
  %v769 = vmax.f32 %v522, %v690
  %v770 = vmax.f32 %v524, %v693
  %v771 = vmax.f32 %v525, %v695
  %v772 = vmax.f32 %v527, %v698
  %v773 = vmax.f32 %v528, %v700
  %v774 = vmax.f32 %v530, %v703
  %v775 = vmax.f32 %v531, %v705
  %v776 = vmax.f32 %v533, %v708
  %v777 = vmax.f32 %v534, %v710
  %v778 = vmax.f32 %v536, %v713
  %v779 = vmax.f32 %v537, %v715
  %vm780 = vcmask 1045504
  %v781 = vrot.slane %v491, 2
  %v782 = vrot.slane %v492, 2
  %v783 = vsel %vm780, %v781, %v782
  %v784 = vrot.slane %v493, 2
  %v785 = vsel %vm780, %v782, %v784
  %v786 = vrot.slane %v494, 2
  %v787 = vrot.slane %v495, 2
  %v788 = vsel %vm780, %v786, %v787
  %v789 = vrot.slane %v496, 2
  %v790 = vsel %vm780, %v787, %v789
  %v791 = vrot.slane %v497, 2
  %v792 = vrot.slane %v498, 2
  %v793 = vsel %vm780, %v791, %v792
  %v794 = vrot.slane %v499, 2
  %v795 = vsel %vm780, %v792, %v794
  %v796 = vrot.slane %v500, 2
  %v797 = vrot.slane %v501, 2
  %v798 = vsel %vm780, %v796, %v797
  %v799 = vrot.slane %v502, 2
  %v800 = vsel %vm780, %v797, %v799
  %v801 = vrot.slane %v503, 2
  %v802 = vrot.slane %v504, 2
  %v803 = vsel %vm780, %v801, %v802
  %v804 = vrot.slane %v505, 2
  %v805 = vsel %vm780, %v802, %v804
  %v806 = vrot.slane %v506, 2
  %v807 = vrot.slane %v507, 2
  %v808 = vsel %vm780, %v806, %v807
  %v809 = vrot.slane %v508, 2
  %v810 = vsel %vm780, %v807, %v809
  %v811 = vrot.slane %v509, 2
  %v812 = vrot.slane %v510, 2
  %v813 = vsel %vm780, %v811, %v812
  %v814 = vrot.slane %v511, 2
  %v815 = vsel %vm780, %v812, %v814
  %v816 = vrot.slane %v512, 2
  %v817 = vrot.slane %v513, 2
  %v818 = vsel %vm780, %v816, %v817
  %v819 = vrot.slane %v514, 2
  %v820 = vsel %vm780, %v817, %v819
  %v821 = vrot.slane %v515, 2
  %v822 = vrot.slane %v516, 2
  %v823 = vsel %vm780, %v821, %v822
  %v824 = vrot.slane %v517, 2
  %v825 = vsel %vm780, %v822, %v824
  %v826 = vrot.slane %v518, 2
  %v827 = vrot.slane %v519, 2
  %v828 = vsel %vm780, %v826, %v827
  %v829 = vrot.slane %v520, 2
  %v830 = vsel %vm780, %v827, %v829
  %v831 = vrot.slane %v521, 2
  %v832 = vrot.slane %v522, 2
  %v833 = vsel %vm780, %v831, %v832
  %v834 = vrot.slane %v523, 2
  %v835 = vsel %vm780, %v832, %v834
  %v836 = vrot.slane %v524, 2
  %v837 = vrot.slane %v525, 2
  %v838 = vsel %vm780, %v836, %v837
  %v839 = vrot.slane %v526, 2
  %v840 = vsel %vm780, %v837, %v839
  %v841 = vrot.slane %v527, 2
  %v842 = vrot.slane %v528, 2
  %v843 = vsel %vm780, %v841, %v842
  %v844 = vrot.slane %v529, 2
  %v845 = vsel %vm780, %v842, %v844
  %v846 = vrot.slane %v530, 2
  %v847 = vrot.slane %v531, 2
  %v848 = vsel %vm780, %v846, %v847
  %v849 = vrot.slane %v532, 2
  %v850 = vsel %vm780, %v847, %v849
  %v851 = vrot.slane %v533, 2
  %v852 = vrot.slane %v534, 2
  %v853 = vsel %vm780, %v851, %v852
  %v854 = vrot.slane %v535, 2
  %v855 = vsel %vm780, %v852, %v854
  %v856 = vrot.slane %v536, 2
  %v857 = vrot.slane %v537, 2
  %v858 = vsel %vm780, %v856, %v857
  %v859 = vrot.slane %v538, 2
  %v860 = vsel %vm780, %v857, %v859
  %v893 = vmax.f32 %v748, %v783
  %v894 = vmax.f32 %v749, %v785
  %v895 = vmax.f32 %v750, %v788
  %v896 = vmax.f32 %v751, %v790
  %v897 = vmax.f32 %v752, %v793
  %v898 = vmax.f32 %v753, %v795
  %v899 = vmax.f32 %v754, %v798
  %v900 = vmax.f32 %v755, %v800
  %v901 = vmax.f32 %v756, %v803
  %v902 = vmax.f32 %v757, %v805
  %v903 = vmax.f32 %v758, %v808
  %v904 = vmax.f32 %v759, %v810
  %v905 = vmax.f32 %v760, %v813
  %v906 = vmax.f32 %v761, %v815
  %v907 = vmax.f32 %v762, %v818
  %v908 = vmax.f32 %v763, %v820
  %v909 = vmax.f32 %v764, %v823
  %v910 = vmax.f32 %v765, %v825
  %v911 = vmax.f32 %v766, %v828
  %v912 = vmax.f32 %v767, %v830
  %v913 = vmax.f32 %v768, %v833
  %v914 = vmax.f32 %v769, %v835
  %v915 = vmax.f32 %v770, %v838
  %v916 = vmax.f32 %v771, %v840
  %v917 = vmax.f32 %v772, %v843
  %v918 = vmax.f32 %v773, %v845
  %v919 = vmax.f32 %v774, %v848
  %v920 = vmax.f32 %v775, %v850
  %v921 = vmax.f32 %v776, %v853
  %v922 = vmax.f32 %v777, %v855
  %v923 = vmax.f32 %v778, %v858
  %v924 = vmax.f32 %v779, %v860
  %v973 = vrot.slane %v443, 1
  %v974 = vrot.slane %v444, 1
  %v975 = vsel %vm635, %v973, %v974
  %v976 = vrot.slane %v445, 1
  %v977 = vsel %vm635, %v974, %v976
  %v978 = vrot.slane %v446, 1
  %v979 = vrot.slane %v447, 1
  %v980 = vsel %vm635, %v978, %v979
  %v981 = vrot.slane %v448, 1
  %v982 = vsel %vm635, %v979, %v981
  %v983 = vrot.slane %v449, 1
  %v984 = vrot.slane %v450, 1
  %v985 = vsel %vm635, %v983, %v984
  %v986 = vrot.slane %v451, 1
  %v987 = vsel %vm635, %v984, %v986
  %v988 = vrot.slane %v452, 1
  %v989 = vrot.slane %v453, 1
  %v990 = vsel %vm635, %v988, %v989
  %v991 = vrot.slane %v454, 1
  %v992 = vsel %vm635, %v989, %v991
  %v993 = vrot.slane %v455, 1
  %v994 = vrot.slane %v456, 1
  %v995 = vsel %vm635, %v993, %v994
  %v996 = vrot.slane %v457, 1
  %v997 = vsel %vm635, %v994, %v996
  %v998 = vrot.slane %v458, 1
  %v999 = vrot.slane %v459, 1
  %v1000 = vsel %vm635, %v998, %v999
  %v1001 = vrot.slane %v460, 1
  %v1002 = vsel %vm635, %v999, %v1001
  %v1003 = vrot.slane %v461, 1
  %v1004 = vrot.slane %v462, 1
  %v1005 = vsel %vm635, %v1003, %v1004
  %v1006 = vrot.slane %v463, 1
  %v1007 = vsel %vm635, %v1004, %v1006
  %v1008 = vrot.slane %v464, 1
  %v1009 = vrot.slane %v465, 1
  %v1010 = vsel %vm635, %v1008, %v1009
  %v1011 = vrot.slane %v466, 1
  %v1012 = vsel %vm635, %v1009, %v1011
  %v1013 = vrot.slane %v467, 1
  %v1014 = vrot.slane %v468, 1
  %v1015 = vsel %vm635, %v1013, %v1014
  %v1016 = vrot.slane %v469, 1
  %v1017 = vsel %vm635, %v1014, %v1016
  %v1018 = vrot.slane %v470, 1
  %v1019 = vrot.slane %v471, 1
  %v1020 = vsel %vm635, %v1018, %v1019
  %v1021 = vrot.slane %v472, 1
  %v1022 = vsel %vm635, %v1019, %v1021
  %v1023 = vrot.slane %v473, 1
  %v1024 = vrot.slane %v474, 1
  %v1025 = vsel %vm635, %v1023, %v1024
  %v1026 = vrot.slane %v475, 1
  %v1027 = vsel %vm635, %v1024, %v1026
  %v1028 = vrot.slane %v476, 1
  %v1029 = vrot.slane %v477, 1
  %v1030 = vsel %vm635, %v1028, %v1029
  %v1031 = vrot.slane %v478, 1
  %v1032 = vsel %vm635, %v1029, %v1031
  %v1033 = vrot.slane %v479, 1
  %v1034 = vrot.slane %v480, 1
  %v1035 = vsel %vm635, %v1033, %v1034
  %v1036 = vrot.slane %v481, 1
  %v1037 = vsel %vm635, %v1034, %v1036
  %v1038 = vrot.slane %v482, 1
  %v1039 = vrot.slane %v483, 1
  %v1040 = vsel %vm635, %v1038, %v1039
  %v1041 = vrot.slane %v484, 1
  %v1042 = vsel %vm635, %v1039, %v1041
  %v1043 = vrot.slane %v485, 1
  %v1044 = vrot.slane %v486, 1
  %v1045 = vsel %vm635, %v1043, %v1044
  %v1046 = vrot.slane %v487, 1
  %v1047 = vsel %vm635, %v1044, %v1046
  %v1048 = vrot.slane %v488, 1
  %v1049 = vrot.slane %v489, 1
  %v1050 = vsel %vm635, %v1048, %v1049
  %v1051 = vrot.slane %v490, 1
  %v1052 = vsel %vm635, %v1049, %v1051
  %v1085 = vmin.f32 %v443, %v975
  %v1086 = vmin.f32 %v444, %v977
  %v1087 = vmin.f32 %v446, %v980
  %v1088 = vmin.f32 %v447, %v982
  %v1089 = vmin.f32 %v449, %v985
  %v1090 = vmin.f32 %v450, %v987
  %v1091 = vmin.f32 %v452, %v990
  %v1092 = vmin.f32 %v453, %v992
  %v1093 = vmin.f32 %v455, %v995
  %v1094 = vmin.f32 %v456, %v997
  %v1095 = vmin.f32 %v458, %v1000
  %v1096 = vmin.f32 %v459, %v1002
  %v1097 = vmin.f32 %v461, %v1005
  %v1098 = vmin.f32 %v462, %v1007
  %v1099 = vmin.f32 %v464, %v1010
  %v1100 = vmin.f32 %v465, %v1012
  %v1101 = vmin.f32 %v467, %v1015
  %v1102 = vmin.f32 %v468, %v1017
  %v1103 = vmin.f32 %v470, %v1020
  %v1104 = vmin.f32 %v471, %v1022
  %v1105 = vmin.f32 %v473, %v1025
  %v1106 = vmin.f32 %v474, %v1027
  %v1107 = vmin.f32 %v476, %v1030
  %v1108 = vmin.f32 %v477, %v1032
  %v1109 = vmin.f32 %v479, %v1035
  %v1110 = vmin.f32 %v480, %v1037
  %v1111 = vmin.f32 %v482, %v1040
  %v1112 = vmin.f32 %v483, %v1042
  %v1113 = vmin.f32 %v485, %v1045
  %v1114 = vmin.f32 %v486, %v1047
  %v1115 = vmin.f32 %v488, %v1050
  %v1116 = vmin.f32 %v489, %v1052
  %v1117 = vrot.slane %v443, 2
  %v1118 = vrot.slane %v444, 2
  %v1119 = vsel %vm780, %v1117, %v1118
  %v1120 = vrot.slane %v445, 2
  %v1121 = vsel %vm780, %v1118, %v1120
  %v1122 = vrot.slane %v446, 2
  %v1123 = vrot.slane %v447, 2
  %v1124 = vsel %vm780, %v1122, %v1123
  %v1125 = vrot.slane %v448, 2
  %v1126 = vsel %vm780, %v1123, %v1125
  %v1127 = vrot.slane %v449, 2
  %v1128 = vrot.slane %v450, 2
  %v1129 = vsel %vm780, %v1127, %v1128
  %v1130 = vrot.slane %v451, 2
  %v1131 = vsel %vm780, %v1128, %v1130
  %v1132 = vrot.slane %v452, 2
  %v1133 = vrot.slane %v453, 2
  %v1134 = vsel %vm780, %v1132, %v1133
  %v1135 = vrot.slane %v454, 2
  %v1136 = vsel %vm780, %v1133, %v1135
  %v1137 = vrot.slane %v455, 2
  %v1138 = vrot.slane %v456, 2
  %v1139 = vsel %vm780, %v1137, %v1138
  %v1140 = vrot.slane %v457, 2
  %v1141 = vsel %vm780, %v1138, %v1140
  %v1142 = vrot.slane %v458, 2
  %v1143 = vrot.slane %v459, 2
  %v1144 = vsel %vm780, %v1142, %v1143
  %v1145 = vrot.slane %v460, 2
  %v1146 = vsel %vm780, %v1143, %v1145
  %v1147 = vrot.slane %v461, 2
  %v1148 = vrot.slane %v462, 2
  %v1149 = vsel %vm780, %v1147, %v1148
  %v1150 = vrot.slane %v463, 2
  %v1151 = vsel %vm780, %v1148, %v1150
  %v1152 = vrot.slane %v464, 2
  %v1153 = vrot.slane %v465, 2
  %v1154 = vsel %vm780, %v1152, %v1153
  %v1155 = vrot.slane %v466, 2
  %v1156 = vsel %vm780, %v1153, %v1155
  %v1157 = vrot.slane %v467, 2
  %v1158 = vrot.slane %v468, 2
  %v1159 = vsel %vm780, %v1157, %v1158
  %v1160 = vrot.slane %v469, 2
  %v1161 = vsel %vm780, %v1158, %v1160
  %v1162 = vrot.slane %v470, 2
  %v1163 = vrot.slane %v471, 2
  %v1164 = vsel %vm780, %v1162, %v1163
  %v1165 = vrot.slane %v472, 2
  %v1166 = vsel %vm780, %v1163, %v1165
  %v1167 = vrot.slane %v473, 2
  %v1168 = vrot.slane %v474, 2
  %v1169 = vsel %vm780, %v1167, %v1168
  %v1170 = vrot.slane %v475, 2
  %v1171 = vsel %vm780, %v1168, %v1170
  %v1172 = vrot.slane %v476, 2
  %v1173 = vrot.slane %v477, 2
  %v1174 = vsel %vm780, %v1172, %v1173
  %v1175 = vrot.slane %v478, 2
  %v1176 = vsel %vm780, %v1173, %v1175
  %v1177 = vrot.slane %v479, 2
  %v1178 = vrot.slane %v480, 2
  %v1179 = vsel %vm780, %v1177, %v1178
  %v1180 = vrot.slane %v481, 2
  %v1181 = vsel %vm780, %v1178, %v1180
  %v1182 = vrot.slane %v482, 2
  %v1183 = vrot.slane %v483, 2
  %v1184 = vsel %vm780, %v1182, %v1183
  %v1185 = vrot.slane %v484, 2
  %v1186 = vsel %vm780, %v1183, %v1185
  %v1187 = vrot.slane %v485, 2
  %v1188 = vrot.slane %v486, 2
  %v1189 = vsel %vm780, %v1187, %v1188
  %v1190 = vrot.slane %v487, 2
  %v1191 = vsel %vm780, %v1188, %v1190
  %v1192 = vrot.slane %v488, 2
  %v1193 = vrot.slane %v489, 2
  %v1194 = vsel %vm780, %v1192, %v1193
  %v1195 = vrot.slane %v490, 2
  %v1196 = vsel %vm780, %v1193, %v1195
  %v1229 = vmin.f32 %v1085, %v1119
  %v1230 = vmin.f32 %v1086, %v1121
  %v1231 = vmin.f32 %v1087, %v1124
  %v1232 = vmin.f32 %v1088, %v1126
  %v1233 = vmin.f32 %v1089, %v1129
  %v1234 = vmin.f32 %v1090, %v1131
  %v1235 = vmin.f32 %v1091, %v1134
  %v1236 = vmin.f32 %v1092, %v1136
  %v1237 = vmin.f32 %v1093, %v1139
  %v1238 = vmin.f32 %v1094, %v1141
  %v1239 = vmin.f32 %v1095, %v1144
  %v1240 = vmin.f32 %v1096, %v1146
  %v1241 = vmin.f32 %v1097, %v1149
  %v1242 = vmin.f32 %v1098, %v1151
  %v1243 = vmin.f32 %v1099, %v1154
  %v1244 = vmin.f32 %v1100, %v1156
  %v1245 = vmin.f32 %v1101, %v1159
  %v1246 = vmin.f32 %v1102, %v1161
  %v1247 = vmin.f32 %v1103, %v1164
  %v1248 = vmin.f32 %v1104, %v1166
  %v1249 = vmin.f32 %v1105, %v1169
  %v1250 = vmin.f32 %v1106, %v1171
  %v1251 = vmin.f32 %v1107, %v1174
  %v1252 = vmin.f32 %v1108, %v1176
  %v1253 = vmin.f32 %v1109, %v1179
  %v1254 = vmin.f32 %v1110, %v1181
  %v1255 = vmin.f32 %v1111, %v1184
  %v1256 = vmin.f32 %v1112, %v1186
  %v1257 = vmin.f32 %v1113, %v1189
  %v1258 = vmin.f32 %v1114, %v1191
  %v1259 = vmin.f32 %v1115, %v1194
  %v1260 = vmin.f32 %v1116, %v1196
  %v1309 = vrot.slane %v539, 1
  %v1310 = vrot.slane %v540, 1
  %v1311 = vsel %vm635, %v1309, %v1310
  %v1312 = vrot.slane %v541, 1
  %v1313 = vsel %vm635, %v1310, %v1312
  %v1314 = vrot.slane %v542, 1
  %v1315 = vrot.slane %v543, 1
  %v1316 = vsel %vm635, %v1314, %v1315
  %v1317 = vrot.slane %v544, 1
  %v1318 = vsel %vm635, %v1315, %v1317
  %v1319 = vrot.slane %v545, 1
  %v1320 = vrot.slane %v546, 1
  %v1321 = vsel %vm635, %v1319, %v1320
  %v1322 = vrot.slane %v547, 1
  %v1323 = vsel %vm635, %v1320, %v1322
  %v1324 = vrot.slane %v548, 1
  %v1325 = vrot.slane %v549, 1
  %v1326 = vsel %vm635, %v1324, %v1325
  %v1327 = vrot.slane %v550, 1
  %v1328 = vsel %vm635, %v1325, %v1327
  %v1329 = vrot.slane %v551, 1
  %v1330 = vrot.slane %v552, 1
  %v1331 = vsel %vm635, %v1329, %v1330
  %v1332 = vrot.slane %v553, 1
  %v1333 = vsel %vm635, %v1330, %v1332
  %v1334 = vrot.slane %v554, 1
  %v1335 = vrot.slane %v555, 1
  %v1336 = vsel %vm635, %v1334, %v1335
  %v1337 = vrot.slane %v556, 1
  %v1338 = vsel %vm635, %v1335, %v1337
  %v1339 = vrot.slane %v557, 1
  %v1340 = vrot.slane %v558, 1
  %v1341 = vsel %vm635, %v1339, %v1340
  %v1342 = vrot.slane %v559, 1
  %v1343 = vsel %vm635, %v1340, %v1342
  %v1344 = vrot.slane %v560, 1
  %v1345 = vrot.slane %v561, 1
  %v1346 = vsel %vm635, %v1344, %v1345
  %v1347 = vrot.slane %v562, 1
  %v1348 = vsel %vm635, %v1345, %v1347
  %v1349 = vrot.slane %v563, 1
  %v1350 = vrot.slane %v564, 1
  %v1351 = vsel %vm635, %v1349, %v1350
  %v1352 = vrot.slane %v565, 1
  %v1353 = vsel %vm635, %v1350, %v1352
  %v1354 = vrot.slane %v566, 1
  %v1355 = vrot.slane %v567, 1
  %v1356 = vsel %vm635, %v1354, %v1355
  %v1357 = vrot.slane %v568, 1
  %v1358 = vsel %vm635, %v1355, %v1357
  %v1359 = vrot.slane %v569, 1
  %v1360 = vrot.slane %v570, 1
  %v1361 = vsel %vm635, %v1359, %v1360
  %v1362 = vrot.slane %v571, 1
  %v1363 = vsel %vm635, %v1360, %v1362
  %v1364 = vrot.slane %v572, 1
  %v1365 = vrot.slane %v573, 1
  %v1366 = vsel %vm635, %v1364, %v1365
  %v1367 = vrot.slane %v574, 1
  %v1368 = vsel %vm635, %v1365, %v1367
  %v1369 = vrot.slane %v575, 1
  %v1370 = vrot.slane %v576, 1
  %v1371 = vsel %vm635, %v1369, %v1370
  %v1372 = vrot.slane %v577, 1
  %v1373 = vsel %vm635, %v1370, %v1372
  %v1374 = vrot.slane %v578, 1
  %v1375 = vrot.slane %v579, 1
  %v1376 = vsel %vm635, %v1374, %v1375
  %v1377 = vrot.slane %v580, 1
  %v1378 = vsel %vm635, %v1375, %v1377
  %v1379 = vrot.slane %v581, 1
  %v1380 = vrot.slane %v582, 1
  %v1381 = vsel %vm635, %v1379, %v1380
  %v1382 = vrot.slane %v583, 1
  %v1383 = vsel %vm635, %v1380, %v1382
  %v1384 = vrot.slane %v584, 1
  %v1385 = vrot.slane %v585, 1
  %v1386 = vsel %vm635, %v1384, %v1385
  %v1387 = vrot.slane %v586, 1
  %v1388 = vsel %vm635, %v1385, %v1387
  %v1421 = vmin.f32 %v539, %v1311
  %v1422 = vmin.f32 %v540, %v1313
  %v1423 = vmin.f32 %v542, %v1316
  %v1424 = vmin.f32 %v543, %v1318
  %v1425 = vmin.f32 %v545, %v1321
  %v1426 = vmin.f32 %v546, %v1323
  %v1427 = vmin.f32 %v548, %v1326
  %v1428 = vmin.f32 %v549, %v1328
  %v1429 = vmin.f32 %v551, %v1331
  %v1430 = vmin.f32 %v552, %v1333
  %v1431 = vmin.f32 %v554, %v1336
  %v1432 = vmin.f32 %v555, %v1338
  %v1433 = vmin.f32 %v557, %v1341
  %v1434 = vmin.f32 %v558, %v1343
  %v1435 = vmin.f32 %v560, %v1346
  %v1436 = vmin.f32 %v561, %v1348
  %v1437 = vmin.f32 %v563, %v1351
  %v1438 = vmin.f32 %v564, %v1353
  %v1439 = vmin.f32 %v566, %v1356
  %v1440 = vmin.f32 %v567, %v1358
  %v1441 = vmin.f32 %v569, %v1361
  %v1442 = vmin.f32 %v570, %v1363
  %v1443 = vmin.f32 %v572, %v1366
  %v1444 = vmin.f32 %v573, %v1368
  %v1445 = vmin.f32 %v575, %v1371
  %v1446 = vmin.f32 %v576, %v1373
  %v1447 = vmin.f32 %v578, %v1376
  %v1448 = vmin.f32 %v579, %v1378
  %v1449 = vmin.f32 %v581, %v1381
  %v1450 = vmin.f32 %v582, %v1383
  %v1451 = vmin.f32 %v584, %v1386
  %v1452 = vmin.f32 %v585, %v1388
  %v1453 = vmax.f32 %v539, %v1311
  %v1454 = vmax.f32 %v540, %v1313
  %v1455 = vmax.f32 %v542, %v1316
  %v1456 = vmax.f32 %v543, %v1318
  %v1457 = vmax.f32 %v545, %v1321
  %v1458 = vmax.f32 %v546, %v1323
  %v1459 = vmax.f32 %v548, %v1326
  %v1460 = vmax.f32 %v549, %v1328
  %v1461 = vmax.f32 %v551, %v1331
  %v1462 = vmax.f32 %v552, %v1333
  %v1463 = vmax.f32 %v554, %v1336
  %v1464 = vmax.f32 %v555, %v1338
  %v1465 = vmax.f32 %v557, %v1341
  %v1466 = vmax.f32 %v558, %v1343
  %v1467 = vmax.f32 %v560, %v1346
  %v1468 = vmax.f32 %v561, %v1348
  %v1469 = vmax.f32 %v563, %v1351
  %v1470 = vmax.f32 %v564, %v1353
  %v1471 = vmax.f32 %v566, %v1356
  %v1472 = vmax.f32 %v567, %v1358
  %v1473 = vmax.f32 %v569, %v1361
  %v1474 = vmax.f32 %v570, %v1363
  %v1475 = vmax.f32 %v572, %v1366
  %v1476 = vmax.f32 %v573, %v1368
  %v1477 = vmax.f32 %v575, %v1371
  %v1478 = vmax.f32 %v576, %v1373
  %v1479 = vmax.f32 %v578, %v1376
  %v1480 = vmax.f32 %v579, %v1378
  %v1481 = vmax.f32 %v581, %v1381
  %v1482 = vmax.f32 %v582, %v1383
  %v1483 = vmax.f32 %v584, %v1386
  %v1484 = vmax.f32 %v585, %v1388
  %v1485 = vrot.slane %v539, 2
  %v1486 = vrot.slane %v540, 2
  %v1487 = vsel %vm780, %v1485, %v1486
  %v1488 = vrot.slane %v541, 2
  %v1489 = vsel %vm780, %v1486, %v1488
  %v1490 = vrot.slane %v542, 2
  %v1491 = vrot.slane %v543, 2
  %v1492 = vsel %vm780, %v1490, %v1491
  %v1493 = vrot.slane %v544, 2
  %v1494 = vsel %vm780, %v1491, %v1493
  %v1495 = vrot.slane %v545, 2
  %v1496 = vrot.slane %v546, 2
  %v1497 = vsel %vm780, %v1495, %v1496
  %v1498 = vrot.slane %v547, 2
  %v1499 = vsel %vm780, %v1496, %v1498
  %v1500 = vrot.slane %v548, 2
  %v1501 = vrot.slane %v549, 2
  %v1502 = vsel %vm780, %v1500, %v1501
  %v1503 = vrot.slane %v550, 2
  %v1504 = vsel %vm780, %v1501, %v1503
  %v1505 = vrot.slane %v551, 2
  %v1506 = vrot.slane %v552, 2
  %v1507 = vsel %vm780, %v1505, %v1506
  %v1508 = vrot.slane %v553, 2
  %v1509 = vsel %vm780, %v1506, %v1508
  %v1510 = vrot.slane %v554, 2
  %v1511 = vrot.slane %v555, 2
  %v1512 = vsel %vm780, %v1510, %v1511
  %v1513 = vrot.slane %v556, 2
  %v1514 = vsel %vm780, %v1511, %v1513
  %v1515 = vrot.slane %v557, 2
  %v1516 = vrot.slane %v558, 2
  %v1517 = vsel %vm780, %v1515, %v1516
  %v1518 = vrot.slane %v559, 2
  %v1519 = vsel %vm780, %v1516, %v1518
  %v1520 = vrot.slane %v560, 2
  %v1521 = vrot.slane %v561, 2
  %v1522 = vsel %vm780, %v1520, %v1521
  %v1523 = vrot.slane %v562, 2
  %v1524 = vsel %vm780, %v1521, %v1523
  %v1525 = vrot.slane %v563, 2
  %v1526 = vrot.slane %v564, 2
  %v1527 = vsel %vm780, %v1525, %v1526
  %v1528 = vrot.slane %v565, 2
  %v1529 = vsel %vm780, %v1526, %v1528
  %v1530 = vrot.slane %v566, 2
  %v1531 = vrot.slane %v567, 2
  %v1532 = vsel %vm780, %v1530, %v1531
  %v1533 = vrot.slane %v568, 2
  %v1534 = vsel %vm780, %v1531, %v1533
  %v1535 = vrot.slane %v569, 2
  %v1536 = vrot.slane %v570, 2
  %v1537 = vsel %vm780, %v1535, %v1536
  %v1538 = vrot.slane %v571, 2
  %v1539 = vsel %vm780, %v1536, %v1538
  %v1540 = vrot.slane %v572, 2
  %v1541 = vrot.slane %v573, 2
  %v1542 = vsel %vm780, %v1540, %v1541
  %v1543 = vrot.slane %v574, 2
  %v1544 = vsel %vm780, %v1541, %v1543
  %v1545 = vrot.slane %v575, 2
  %v1546 = vrot.slane %v576, 2
  %v1547 = vsel %vm780, %v1545, %v1546
  %v1548 = vrot.slane %v577, 2
  %v1549 = vsel %vm780, %v1546, %v1548
  %v1550 = vrot.slane %v578, 2
  %v1551 = vrot.slane %v579, 2
  %v1552 = vsel %vm780, %v1550, %v1551
  %v1553 = vrot.slane %v580, 2
  %v1554 = vsel %vm780, %v1551, %v1553
  %v1555 = vrot.slane %v581, 2
  %v1556 = vrot.slane %v582, 2
  %v1557 = vsel %vm780, %v1555, %v1556
  %v1558 = vrot.slane %v583, 2
  %v1559 = vsel %vm780, %v1556, %v1558
  %v1560 = vrot.slane %v584, 2
  %v1561 = vrot.slane %v585, 2
  %v1562 = vsel %vm780, %v1560, %v1561
  %v1563 = vrot.slane %v586, 2
  %v1564 = vsel %vm780, %v1561, %v1563
  %v1597 = vmin.f32 %v1453, %v1487
  %v1598 = vmin.f32 %v1454, %v1489
  %v1599 = vmin.f32 %v1455, %v1492
  %v1600 = vmin.f32 %v1456, %v1494
  %v1601 = vmin.f32 %v1457, %v1497
  %v1602 = vmin.f32 %v1458, %v1499
  %v1603 = vmin.f32 %v1459, %v1502
  %v1604 = vmin.f32 %v1460, %v1504
  %v1605 = vmin.f32 %v1461, %v1507
  %v1606 = vmin.f32 %v1462, %v1509
  %v1607 = vmin.f32 %v1463, %v1512
  %v1608 = vmin.f32 %v1464, %v1514
  %v1609 = vmin.f32 %v1465, %v1517
  %v1610 = vmin.f32 %v1466, %v1519
  %v1611 = vmin.f32 %v1467, %v1522
  %v1612 = vmin.f32 %v1468, %v1524
  %v1613 = vmin.f32 %v1469, %v1527
  %v1614 = vmin.f32 %v1470, %v1529
  %v1615 = vmin.f32 %v1471, %v1532
  %v1616 = vmin.f32 %v1472, %v1534
  %v1617 = vmin.f32 %v1473, %v1537
  %v1618 = vmin.f32 %v1474, %v1539
  %v1619 = vmin.f32 %v1475, %v1542
  %v1620 = vmin.f32 %v1476, %v1544
  %v1621 = vmin.f32 %v1477, %v1547
  %v1622 = vmin.f32 %v1478, %v1549
  %v1623 = vmin.f32 %v1479, %v1552
  %v1624 = vmin.f32 %v1480, %v1554
  %v1625 = vmin.f32 %v1481, %v1557
  %v1626 = vmin.f32 %v1482, %v1559
  %v1627 = vmin.f32 %v1483, %v1562
  %v1628 = vmin.f32 %v1484, %v1564
  %v1629 = vmax.f32 %v1421, %v1597
  %v1630 = vmax.f32 %v1422, %v1598
  %v1631 = vmax.f32 %v1423, %v1599
  %v1632 = vmax.f32 %v1424, %v1600
  %v1633 = vmax.f32 %v1425, %v1601
  %v1634 = vmax.f32 %v1426, %v1602
  %v1635 = vmax.f32 %v1427, %v1603
  %v1636 = vmax.f32 %v1428, %v1604
  %v1637 = vmax.f32 %v1429, %v1605
  %v1638 = vmax.f32 %v1430, %v1606
  %v1639 = vmax.f32 %v1431, %v1607
  %v1640 = vmax.f32 %v1432, %v1608
  %v1641 = vmax.f32 %v1433, %v1609
  %v1642 = vmax.f32 %v1434, %v1610
  %v1643 = vmax.f32 %v1435, %v1611
  %v1644 = vmax.f32 %v1436, %v1612
  %v1645 = vmax.f32 %v1437, %v1613
  %v1646 = vmax.f32 %v1438, %v1614
  %v1647 = vmax.f32 %v1439, %v1615
  %v1648 = vmax.f32 %v1440, %v1616
  %v1649 = vmax.f32 %v1441, %v1617
  %v1650 = vmax.f32 %v1442, %v1618
  %v1651 = vmax.f32 %v1443, %v1619
  %v1652 = vmax.f32 %v1444, %v1620
  %v1653 = vmax.f32 %v1445, %v1621
  %v1654 = vmax.f32 %v1446, %v1622
  %v1655 = vmax.f32 %v1447, %v1623
  %v1656 = vmax.f32 %v1448, %v1624
  %v1657 = vmax.f32 %v1449, %v1625
  %v1658 = vmax.f32 %v1450, %v1626
  %v1659 = vmax.f32 %v1451, %v1627
  %v1660 = vmax.f32 %v1452, %v1628
  %v1661 = vmin.f32 %v893, %v1629
  %v1662 = vmin.f32 %v894, %v1630
  %v1663 = vmin.f32 %v895, %v1631
  %v1664 = vmin.f32 %v896, %v1632
  %v1665 = vmin.f32 %v897, %v1633
  %v1666 = vmin.f32 %v898, %v1634
  %v1667 = vmin.f32 %v899, %v1635
  %v1668 = vmin.f32 %v900, %v1636
  %v1669 = vmin.f32 %v901, %v1637
  %v1670 = vmin.f32 %v902, %v1638
  %v1671 = vmin.f32 %v903, %v1639
  %v1672 = vmin.f32 %v904, %v1640
  %v1673 = vmin.f32 %v905, %v1641
  %v1674 = vmin.f32 %v906, %v1642
  %v1675 = vmin.f32 %v907, %v1643
  %v1676 = vmin.f32 %v908, %v1644
  %v1677 = vmin.f32 %v909, %v1645
  %v1678 = vmin.f32 %v910, %v1646
  %v1679 = vmin.f32 %v911, %v1647
  %v1680 = vmin.f32 %v912, %v1648
  %v1681 = vmin.f32 %v913, %v1649
  %v1682 = vmin.f32 %v914, %v1650
  %v1683 = vmin.f32 %v915, %v1651
  %v1684 = vmin.f32 %v916, %v1652
  %v1685 = vmin.f32 %v917, %v1653
  %v1686 = vmin.f32 %v918, %v1654
  %v1687 = vmin.f32 %v919, %v1655
  %v1688 = vmin.f32 %v920, %v1656
  %v1689 = vmin.f32 %v921, %v1657
  %v1690 = vmin.f32 %v922, %v1658
  %v1691 = vmin.f32 %v923, %v1659
  %v1692 = vmin.f32 %v924, %v1660
  %v1693 = vmax.f32 %v893, %v1629
  %v1694 = vmax.f32 %v894, %v1630
  %v1695 = vmax.f32 %v895, %v1631
  %v1696 = vmax.f32 %v896, %v1632
  %v1697 = vmax.f32 %v897, %v1633
  %v1698 = vmax.f32 %v898, %v1634
  %v1699 = vmax.f32 %v899, %v1635
  %v1700 = vmax.f32 %v900, %v1636
  %v1701 = vmax.f32 %v901, %v1637
  %v1702 = vmax.f32 %v902, %v1638
  %v1703 = vmax.f32 %v903, %v1639
  %v1704 = vmax.f32 %v904, %v1640
  %v1705 = vmax.f32 %v905, %v1641
  %v1706 = vmax.f32 %v906, %v1642
  %v1707 = vmax.f32 %v907, %v1643
  %v1708 = vmax.f32 %v908, %v1644
  %v1709 = vmax.f32 %v909, %v1645
  %v1710 = vmax.f32 %v910, %v1646
  %v1711 = vmax.f32 %v911, %v1647
  %v1712 = vmax.f32 %v912, %v1648
  %v1713 = vmax.f32 %v913, %v1649
  %v1714 = vmax.f32 %v914, %v1650
  %v1715 = vmax.f32 %v915, %v1651
  %v1716 = vmax.f32 %v916, %v1652
  %v1717 = vmax.f32 %v917, %v1653
  %v1718 = vmax.f32 %v918, %v1654
  %v1719 = vmax.f32 %v919, %v1655
  %v1720 = vmax.f32 %v920, %v1656
  %v1721 = vmax.f32 %v921, %v1657
  %v1722 = vmax.f32 %v922, %v1658
  %v1723 = vmax.f32 %v923, %v1659
  %v1724 = vmax.f32 %v924, %v1660
  %v1725 = vmin.f32 %v1693, %v1229
  %v1726 = vmin.f32 %v1694, %v1230
  %v1727 = vmin.f32 %v1695, %v1231
  %v1728 = vmin.f32 %v1696, %v1232
  %v1729 = vmin.f32 %v1697, %v1233
  %v1730 = vmin.f32 %v1698, %v1234
  %v1731 = vmin.f32 %v1699, %v1235
  %v1732 = vmin.f32 %v1700, %v1236
  %v1733 = vmin.f32 %v1701, %v1237
  %v1734 = vmin.f32 %v1702, %v1238
  %v1735 = vmin.f32 %v1703, %v1239
  %v1736 = vmin.f32 %v1704, %v1240
  %v1737 = vmin.f32 %v1705, %v1241
  %v1738 = vmin.f32 %v1706, %v1242
  %v1739 = vmin.f32 %v1707, %v1243
  %v1740 = vmin.f32 %v1708, %v1244
  %v1741 = vmin.f32 %v1709, %v1245
  %v1742 = vmin.f32 %v1710, %v1246
  %v1743 = vmin.f32 %v1711, %v1247
  %v1744 = vmin.f32 %v1712, %v1248
  %v1745 = vmin.f32 %v1713, %v1249
  %v1746 = vmin.f32 %v1714, %v1250
  %v1747 = vmin.f32 %v1715, %v1251
  %v1748 = vmin.f32 %v1716, %v1252
  %v1749 = vmin.f32 %v1717, %v1253
  %v1750 = vmin.f32 %v1718, %v1254
  %v1751 = vmin.f32 %v1719, %v1255
  %v1752 = vmin.f32 %v1720, %v1256
  %v1753 = vmin.f32 %v1721, %v1257
  %v1754 = vmin.f32 %v1722, %v1258
  %v1755 = vmin.f32 %v1723, %v1259
  %v1756 = vmin.f32 %v1724, %v1260
  %v1757 = vmax.f32 %v1661, %v1725
  %v1758 = vmax.f32 %v1662, %v1726
  %v1759 = vmax.f32 %v1663, %v1727
  %v1760 = vmax.f32 %v1664, %v1728
  %v1761 = vmax.f32 %v1665, %v1729
  %v1762 = vmax.f32 %v1666, %v1730
  %v1763 = vmax.f32 %v1667, %v1731
  %v1764 = vmax.f32 %v1668, %v1732
  %v1765 = vmax.f32 %v1669, %v1733
  %v1766 = vmax.f32 %v1670, %v1734
  %v1767 = vmax.f32 %v1671, %v1735
  %v1768 = vmax.f32 %v1672, %v1736
  %v1769 = vmax.f32 %v1673, %v1737
  %v1770 = vmax.f32 %v1674, %v1738
  %v1771 = vmax.f32 %v1675, %v1739
  %v1772 = vmax.f32 %v1676, %v1740
  %v1773 = vmax.f32 %v1677, %v1741
  %v1774 = vmax.f32 %v1678, %v1742
  %v1775 = vmax.f32 %v1679, %v1743
  %v1776 = vmax.f32 %v1680, %v1744
  %v1777 = vmax.f32 %v1681, %v1745
  %v1778 = vmax.f32 %v1682, %v1746
  %v1779 = vmax.f32 %v1683, %v1747
  %v1780 = vmax.f32 %v1684, %v1748
  %v1781 = vmax.f32 %v1685, %v1749
  %v1782 = vmax.f32 %v1686, %v1750
  %v1783 = vmax.f32 %v1687, %v1751
  %v1784 = vmax.f32 %v1688, %v1752
  %v1785 = vmax.f32 %v1689, %v1753
  %v1786 = vmax.f32 %v1690, %v1754
  %v1787 = vmax.f32 %v1691, %v1755
  %v1788 = vmax.f32 %v1692, %v1756
  %1789 = vst.msk [vmem:[%s1] sm:$0xff] %vm41, %v1757
  %1790 = vst.msk [vmem:[%s1 + $0x8] sm:$0xff] %vm41, %v1758
  %1791 = vst.msk [vmem:[%s1 + $0x10] sm:$0xff] %vm41, %v1759
  %1792 = vst.msk [vmem:[%s1 + $0x18] sm:$0xff] %vm41, %v1760
  %1793 = vst.msk [vmem:[%s1 + $0x20] sm:$0xff] %vm41, %v1761
  %1794 = vst.msk [vmem:[%s1 + $0x28] sm:$0xff] %vm41, %v1762
  %1795 = vst.msk [vmem:[%s1 + $0x30] sm:$0xff] %vm41, %v1763
  %1796 = vst.msk [vmem:[%s1 + $0x38] sm:$0xff] %vm41, %v1764
  %1797 = vst.msk [vmem:[%s1 + $0x40] sm:$0xff] %vm41, %v1765
  %1798 = vst.msk [vmem:[%s1 + $0x48] sm:$0xff] %vm41, %v1766
  %1799 = vst.msk [vmem:[%s1 + $0x50] sm:$0xff] %vm41, %v1767
  %1800 = vst.msk [vmem:[%s1 + $0x58] sm:$0xff] %vm41, %v1768
  %1801 = vst.msk [vmem:[%s1 + $0x60] sm:$0xff] %vm41, %v1769
  %1802 = vst.msk [vmem:[%s1 + $0x68] sm:$0xff] %vm41, %v1770
  %1803 = vst.msk [vmem:[%s1 + $0x70] sm:$0xff] %vm41, %v1771
  %1804 = vst.msk [vmem:[%s1 + $0x78] sm:$0xff] %vm41, %v1772
  %1805 = vst.msk [vmem:[%s1 + $0x80] sm:$0xff] %vm41, %v1773
  %1806 = vst.msk [vmem:[%s1 + $0x88] sm:$0xff] %vm41, %v1774
  %1807 = vst.msk [vmem:[%s1 + $0x90] sm:$0xff] %vm41, %v1775
  %1808 = vst.msk [vmem:[%s1 + $0x98] sm:$0xff] %vm41, %v1776
  %1809 = vst.msk [vmem:[%s1 + $0xa0] sm:$0xff] %vm41, %v1777
  %1810 = vst.msk [vmem:[%s1 + $0xa8] sm:$0xff] %vm41, %v1778
  %1811 = vst.msk [vmem:[%s1 + $0xb0] sm:$0xff] %vm41, %v1779
  %1812 = vst.msk [vmem:[%s1 + $0xb8] sm:$0xff] %vm41, %v1780
  %1813 = vst.msk [vmem:[%s1 + $0xc0] sm:$0xff] %vm41, %v1781
  %1814 = vst.msk [vmem:[%s1 + $0xc8] sm:$0xff] %vm41, %v1782
  %1815 = vst.msk [vmem:[%s1 + $0xd0] sm:$0xff] %vm41, %v1783
  %1816 = vst.msk [vmem:[%s1 + $0xd8] sm:$0xff] %vm41, %v1784
  %1817 = vst.msk [vmem:[%s1 + $0xe0] sm:$0xff] %vm41, %v1785
  %1818 = vst.msk [vmem:[%s1 + $0xe8] sm:$0xff] %vm41, %v1786
  %1819 = vst.msk [vmem:[%s1 + $0xf0] sm:$0xff] %vm41, %v1787
  %1820 = vst.msk [vmem:[%s1 + $0xf8] sm:$0xff] %vm41, %v1788
  // Predicated region
  $region6: #{tpu_custom_call.1} parent=0 // pred_check
    _
  $region7: #{tpu_custom_call.1} parent=0 // pred_check_branch
    %1822 = sbr.rel (0) target = $region9
  $region8: #{tpu_custom_call.1} parent=0 // pred_region
    _
  $region9: #{tpu_custom_call.1} parent=0 // pred_fallthru
    _
  // Predicated region
  $region10: #{tpu_custom_call.1} parent=0 // pred_check
    _
  $region11: #{tpu_custom_call.1} parent=0 // pred_check_branch
    %1824 = sbr.rel (0) target = $region13
  $region12: #{tpu_custom_call.1} parent=0 // pred_region
    _
  $region13: #{tpu_custom_call.1} parent=0 // pred_fallthru
    _

</llo_original>
